<compile_context>
chip_gen: v5e
topology: v5e:2x2
jax: 0.10.0
libtpu: 0.0.40
codegen_flags: <defaults>
</compile_context>

<pallas_src>
import functools

import jax
import jax.numpy as jnp
from jax.experimental import pallas as pl
from jax.experimental.pallas import tpu as pltpu

# ---- scaled-down WavLM-base feature extractor config (real: 7 layers, 512 channels) ----
CONV_LAYERS = [(128, 10, 5), (128, 3, 2), (128, 3, 2), (128, 2, 2)]   # (dim, kernel, stride)
EPS = 1e-5


def _gelu(x):
    # exact (erf-based) GELU, matching torch.nn.GELU default used by fairseq
    return 0.5 * x * (1.0 + jax.lax.erf(x * 0.7071067811865476))


# ----------------------------- fused Pallas kernel -----------------------------

def _fe_kernel(*refs, cfg, eps):
    """Whole feature-extractor conv stack for ONE batch element (batch dim is squeezed).

    refs = (x0_taps, w0, gn_gamma, gn_beta, w1..w_{L-1}, out0..out_{L-1})
      x0_taps : (T1, K0)   bf16  layer-0 im2col of the raw waveform (Cin = 1)
      w0      : (K0, C)    bf16
      gn_*    : (1, C)     f32
      w_i     : (K_i,C,C)  bf16  w_i[k, cin, cout]
      out_i   : (T1, C)    f32   = layer-i output right-padded on time to T1
    """
    n_layers = len(cfg)
    x0_ref, w0_ref, g_ref, b_ref = refs[0], refs[1], refs[2], refs[3]
    w_refs = refs[4:4 + n_layers - 1]
    o_refs = refs[4 + n_layers - 1:]

    T1, _ = x0_ref.shape
    C = w0_ref.shape[1]

    # ---- layer 0: conv (one 2-D MXU dot, no reshape) + GroupNorm(C groups) + GELU ----
    y = jnp.dot(x0_ref[...], w0_ref[...], preferred_element_type=jnp.float32)   # (T1, C)
    inv_t = 1.0 / T1
    mean = jnp.sum(y, axis=0, keepdims=True) * inv_t                             # (1, C)
    ex2 = jnp.sum(y * y, axis=0, keepdims=True) * inv_t
    var = jnp.maximum(ex2 - mean * mean, 0.0)
    y = (y - mean) * (jax.lax.rsqrt(var + eps) * g_ref[...]) + b_ref[...]
    o_refs[0][...] = _gelu(y)        # layer-0 length == pad_to, so the ref is fully written

    # ---- layers >= 1: K per-tap dots on strided reads of the previous (padded) output ----
    for i in range(1, n_layers):
        K, s, T_out = cfg[i]
        prev = o_refs[i - 1]
        acc = jnp.zeros((T_out, C), jnp.float32)
        for k in range(K):
            # tap k -> rows k, k+s, ..., k+(T_out-1)*s (always within the valid region)
            tap = prev[pl.ds(k, T_out, stride=s), :].astype(jnp.bfloat16)        # (T_out, C)
            acc = acc + jnp.dot(tap, w_refs[i - 1][k],
                                preferred_element_type=jnp.float32)
        o_refs[i][pl.ds(0, T_out), :] = _gelu(acc)
        o_refs[i][pl.ds(T_out, T1 - T_out), :] = jnp.zeros(
            (T1 - T_out, C), jnp.float32)                                        # right pad


# ----------------------------- wrapper -----------------------------

def wavlm_feature_extractor_layers(data, params):
    """data: (B, T_raw) raw waveform -> list of (B, T_pad, C) arrays (one per conv layer)."""
    B, T_raw = data.shape
    C = CONV_LAYERS[0][0]
    assert all(d == C for d, _, _ in CONV_LAYERS)

    # static per-layer geometry
    cfg = []
    T = T_raw
    for (_, k, s) in CONV_LAYERS:
        T = (T - k) // s + 1
        cfg.append((k, s, T))
    T1 = cfg[0][2]
    # strided taps must never touch the zero-padded region of the previous layer
    t_prev = T1
    for (k, s, t_out) in cfg[1:]:
        assert (t_out - 1) * s + (k - 1) < t_prev, "conv taps would read padded rows"
        t_prev = t_out

    # glue: layer-0 im2col (Cin=1 -> K taps of the raw waveform; ~2x raw bytes, negligible).
    # Layout (B, T1, K0) matches exactly what the kernel consumes per batch block.
    k0, s0, _ = cfg[0]
    x0_taps = jnp.stack(
        [data[:, k:k + s0 * (T1 - 1) + 1:s0] for k in range(k0)], axis=-1
    ).astype(jnp.bfloat16)                                                      # (B, T1, K0)

    # glue: weight reshapes (tiny, once). w_rest[i][k, cin, cout] = torch_w[cout, cin, k].
    w0 = params['conv_w'][0][:, 0, :].T.astype(jnp.bfloat16)                    # (K0, C)
    w_rest = [jnp.transpose(w, (2, 1, 0)).astype(jnp.bfloat16)
              for w in params['conv_w'][1:]]                                    # (K, C, C)
    gn_g = params['gn_g'].reshape(1, C).astype(jnp.float32)
    gn_b = params['gn_b'].reshape(1, C).astype(jnp.float32)

    inputs = (x0_taps, w0, gn_g, gn_b, *w_rest)
    out_shapes = tuple(jax.ShapeDtypeStruct((B, T1, C), jnp.float32) for _ in CONV_LAYERS)

    # batch-parallel grid (uses both TensorCores on v7x); weights get constant index_maps
    in_specs = [
        pl.BlockSpec((pl.Squeezed(), T1, k0), lambda b: (b, 0, 0)),   # x0 taps (per batch)
        pl.BlockSpec((k0, C), lambda b: (0, 0)),                      # w0
        pl.BlockSpec((1, C), lambda b: (0, 0)),                       # gamma
        pl.BlockSpec((1, C), lambda b: (0, 0)),                       # beta
    ] + [pl.BlockSpec(w.shape, lambda b: (0, 0, 0)) for w in w_rest]  # conv weights
    out_specs = tuple(pl.BlockSpec((pl.Squeezed(), T1, C), lambda b: (b, 0, 0))
                      for _ in CONV_LAYERS)

    flops = 0
    trans = 0
    for i, (k, _, t_out) in enumerate(cfg):
        cin = 1 if i == 0 else C
        flops += 2 * B * t_out * k * cin * C
        trans += B * t_out * C                      # one erf per output element
    bytes_accessed = int(sum(a.size * a.dtype.itemsize for a in inputs)
                         + len(cfg) * B * T1 * C * 4)

    outs = pl.pallas_call(
        functools.partial(_fe_kernel, cfg=tuple(cfg), eps=EPS),
        grid=(B,),
        in_specs=in_specs,
        out_specs=out_specs,
        out_shape=out_shapes,
        compiler_params=pltpu.CompilerParams(
            dimension_semantics=("parallel",),
            vmem_limit_bytes=48 * 1024 * 1024),          # v7x-safe (64 MiB physical VMEM)
        cost_estimate=pl.CostEstimate(flops=int(flops), transcendentals=int(trans),
                                      bytes_accessed=bytes_accessed),
    )(*inputs)
    return list(outs)


# ----------------------------- pure-JAX reference (f32) -----------------------------

def _ref_forward(data, params):
    x = data[:, None, :].astype(jnp.float32)                                    # (B, 1, T)
    outs = []
    for i, ((_, k, s), w) in enumerate(zip(CONV_LAYERS, params['conv_w'])):
        x = jax.lax.conv_general_dilated(x, w, window_strides=(s,), padding='VALID',
                                         dimension_numbers=('NCH', 'OIH', 'NCH'))
        if i == 0:
            mean = jnp.mean(x, axis=-1, keepdims=True)
            var = jnp.mean(jnp.square(x - mean), axis=-1, keepdims=True)
            x = (x - mean) * jax.lax.rsqrt(var + EPS)
            x = x * params['gn_g'][None, :, None] + params['gn_b'][None, :, None]
        x = _gelu(x)
        outs.append(x)
    T1 = outs[0].shape[-1]
    return [jnp.transpose(jnp.pad(o, ((0, 0), (0, 0), (0, T1 - o.shape[-1]))), (0, 2, 1))
            for o in outs]


# ----------------------------- synthetic params -----------------------------
# TODO(synk): the real module torch.load()s the wavlm_base.pt checkpoint; synthetic
#             random weights (and a scaled-down conv stack) are used here instead.

def init_params(key):
    keys = jax.random.split(key, len(CONV_LAYERS) + 2)
    conv_w, in_c = [], 1
    for i, (dim, k, _) in enumerate(CONV_LAYERS):
        conv_w.append(0.05 * jax.random.normal(keys[i], (dim, in_c, k), jnp.float32))
        in_c = dim
    gn_g = 1.0 + 0.1 * jax.random.normal(keys[-2], (CONV_LAYERS[0][0],), jnp.float32)
    gn_b = 0.1 * jax.random.normal(keys[-1], (CONV_LAYERS[0][0],), jnp.float32)
    return {'conv_w': conv_w, 'gn_g': gn_g, 'gn_b': gn_b}


# ----------------------------- main -----------------------------

if __name__ == "__main__":
    key = jax.random.PRNGKey(0)
    kd, kp = jax.random.split(key)
    data = jax.random.normal(kd, (2, 400), jnp.float32)      # raw waveform (B, T_raw)
    params = init_params(kp)

    fwd = jax.jit(wavlm_feature_extractor_layers)
    outs = jax.block_until_ready(fwd(data, params))

    refs = _ref_forward(data, params)
    assert len(outs) == len(CONV_LAYERS)
    for o, r in zip(outs, refs):
        assert o.shape == r.shape == outs[0].shape
        assert bool(jnp.all(jnp.isfinite(o)))
        max_err = float(jnp.max(jnp.abs(o - r)))
        mean_err = float(jnp.mean(jnp.abs(o - r)))
        assert max_err < 0.15 and mean_err < 0.02, (
            f"mismatch vs pure-JAX reference: max={max_err}, mean={mean_err}")
    print("KERNEL_OK")
</pallas_src>

<mosaic_0001>
module attributes {stable_mosaic.version = 11 : i64} {
  func.func @_fe_kernel(%arg0: i32, %arg1: memref<1x79x10xbf16, #tpu.memory_space<vmem>>, %arg2: memref<10x128xbf16, #tpu.memory_space<vmem>>, %arg3: memref<1x128xf32, #tpu.memory_space<vmem>>, %arg4: memref<1x128xf32, #tpu.memory_space<vmem>>, %arg5: memref<3x128x128xbf16, #tpu.memory_space<vmem>>, %arg6: memref<3x128x128xbf16, #tpu.memory_space<vmem>>, %arg7: memref<2x128x128xbf16, #tpu.memory_space<vmem>>, %arg8: memref<1x79x128xf32, #tpu.memory_space<vmem>>, %arg9: memref<1x79x128xf32, #tpu.memory_space<vmem>>, %arg10: memref<1x79x128xf32, #tpu.memory_space<vmem>>, %arg11: memref<1x79x128xf32, #tpu.memory_space<vmem>>) attributes {dimension_semantics = [#tpu.dimension_semantics<parallel>], iteration_bounds = array<i64: 2>, scalar_prefetch = 0 : i64, scratch_operands = 0 : i64, tpu.core_type = #tpu.core_type<tc>, window_params = [{transform_indices = @transform_0, window_bounds = array<i64: 1, 79, 10>}, {pipeline_mode = #tpu.pipeline_mode<synchronous>, transform_indices = @transform_1, window_bounds = array<i64: 10, 128>}, {pipeline_mode = #tpu.pipeline_mode<synchronous>, transform_indices = @transform_2, window_bounds = array<i64: 1, 128>}, {pipeline_mode = #tpu.pipeline_mode<synchronous>, transform_indices = @transform_3, window_bounds = array<i64: 1, 128>}, {pipeline_mode = #tpu.pipeline_mode<synchronous>, transform_indices = @transform_4, window_bounds = array<i64: 3, 128, 128>}, {pipeline_mode = #tpu.pipeline_mode<synchronous>, transform_indices = @transform_5, window_bounds = array<i64: 3, 128, 128>}, {pipeline_mode = #tpu.pipeline_mode<synchronous>, transform_indices = @transform_6, window_bounds = array<i64: 2, 128, 128>}, {transform_indices = @transform_7, window_bounds = array<i64: 1, 79, 128>}, {transform_indices = @transform_8, window_bounds = array<i64: 1, 79, 128>}, {transform_indices = @transform_9, window_bounds = array<i64: 1, 79, 128>}, {transform_indices = @transform_10, window_bounds = array<i64: 1, 79, 128>}]} {
    %c0 = arith.constant 0 : index
    %c0_0 = arith.constant 0 : index
    %c0_1 = arith.constant 0 : index
    %0 = vector.load %arg1[%c0, %c0_0, %c0_1] : memref<1x79x10xbf16, #tpu.memory_space<vmem>>, vector<1x79x10xbf16>
    %1 = vector.shape_cast %0 : vector<1x79x10xbf16> to vector<79x10xbf16>
    %c0_2 = arith.constant 0 : index
    %c0_3 = arith.constant 0 : index
    %2 = vector.load %arg2[%c0_2, %c0_3] : memref<10x128xbf16, #tpu.memory_space<vmem>>, vector<10x128xbf16>
    %cst = arith.constant dense<0.000000e+00> : vector<79x128xf32>
    %3 = tpu.matmul %1, %2, %cst {dimension_numbers = #tpu.dot_dimension_numbers<[1], [0], [0], [1], [0, 0, 1, 1], [], []>} : vector<79x10xbf16>, vector<10x128xbf16>, vector<79x128xf32> -> vector<79x128xf32>
    %cst_4 = arith.constant dense<0.000000e+00> : vector<128xf32>
    %4 = vector.multi_reduction <add>, %3, %cst_4 [0] : vector<79x128xf32> to vector<128xf32>
    %5 = vector.shape_cast %4 : vector<128xf32> to vector<1x128xf32>
    %cst_5 = arith.constant 0.0126582282 : f32
    %6 = vector.broadcast %cst_5 : f32 to vector<1x128xf32>
    %7 = arith.mulf %5, %6 : vector<1x128xf32>
    %8 = arith.mulf %3, %3 : vector<79x128xf32>
    %cst_6 = arith.constant dense<0.000000e+00> : vector<128xf32>
    %9 = vector.multi_reduction <add>, %8, %cst_6 [0] : vector<79x128xf32> to vector<128xf32>
    %10 = vector.shape_cast %9 : vector<128xf32> to vector<1x128xf32>
    %cst_7 = arith.constant 0.0126582282 : f32
    %11 = vector.broadcast %cst_7 : f32 to vector<1x128xf32>
    %12 = arith.mulf %10, %11 : vector<1x128xf32>
    %13 = arith.mulf %7, %7 : vector<1x128xf32>
    %14 = arith.subf %12, %13 : vector<1x128xf32>
    %cst_8 = arith.constant 0.000000e+00 : f32
    %15 = vector.broadcast %cst_8 : f32 to vector<1x128xf32>
    %16 = arith.maximumf %14, %15 : vector<1x128xf32>
    %17 = vector.broadcast %7 : vector<1x128xf32> to vector<79x128xf32>
    %18 = arith.subf %3, %17 : vector<79x128xf32>
    %cst_9 = arith.constant 9.99999974E-6 : f32
    %19 = vector.broadcast %cst_9 : f32 to vector<1x128xf32>
    %20 = arith.addf %16, %19 : vector<1x128xf32>
    %21 = math.rsqrt %20 : vector<1x128xf32>
    %c0_10 = arith.constant 0 : index
    %c0_11 = arith.constant 0 : index
    %22 = vector.load %arg3[%c0_10, %c0_11] : memref<1x128xf32, #tpu.memory_space<vmem>>, vector<1x128xf32>
    %23 = arith.mulf %21, %22 : vector<1x128xf32>
    %24 = vector.broadcast %23 : vector<1x128xf32> to vector<79x128xf32>
    %25 = arith.mulf %18, %24 : vector<79x128xf32>
    %c0_12 = arith.constant 0 : index
    %c0_13 = arith.constant 0 : index
    %26 = vector.load %arg4[%c0_12, %c0_13] : memref<1x128xf32, #tpu.memory_space<vmem>>, vector<1x128xf32>
    %27 = vector.broadcast %26 : vector<1x128xf32> to vector<79x128xf32>
    %28 = arith.addf %25, %27 : vector<79x128xf32>
    %cst_14 = arith.constant 5.000000e-01 : f32
    %29 = vector.broadcast %cst_14 : f32 to vector<79x128xf32>
    %30 = arith.mulf %29, %28 : vector<79x128xf32>
    %cst_15 = arith.constant 0.707106769 : f32
    %31 = vector.broadcast %cst_15 : f32 to vector<79x128xf32>
    %32 = arith.mulf %28, %31 : vector<79x128xf32>
    %33 = math.erf %32 : vector<79x128xf32>
    %cst_16 = arith.constant 1.000000e+00 : f32
    %34 = vector.broadcast %cst_16 : f32 to vector<79x128xf32>
    %35 = arith.addf %34, %33 : vector<79x128xf32>
    %36 = arith.mulf %30, %35 : vector<79x128xf32>
    %c0_17 = arith.constant 0 : index
    %c0_18 = arith.constant 0 : index
    %c0_19 = arith.constant 0 : index
    %37 = vector.load %arg8[%c0_17, %c0_18, %c0_19] : memref<1x79x128xf32, #tpu.memory_space<vmem>>, vector<1x79x128xf32>
    %38 = vector.shape_cast %37 : vector<1x79x128xf32> to vector<79x128xf32>
    %39 = vector.shape_cast %36 : vector<79x128xf32> to vector<1x79x128xf32>
    tpu.vector_store %arg8[%c0_17, %c0_18, %c0_19], %39 {strides = array<i32>} : memref<1x79x128xf32, #tpu.memory_space<vmem>>, vector<1x79x128xf32>,
    %cst_20 = arith.constant 0.000000e+00 : f32
    %40 = vector.broadcast %cst_20 : f32 to vector<39x128xf32>
    %c0_21 = arith.constant 0 : index
    %c0_22 = arith.constant 0 : index
    %c0_23 = arith.constant 0 : index
    %41 = tpu.strided_load %arg8[%c0_21, %c0_22, %c0_23] {strides = array<i32: 1, 2, 1>} : memref<1x79x128xf32, #tpu.memory_space<vmem>>, vector<1x39x128xf32>
    %42 = vector.shape_cast %41 : vector<1x39x128xf32> to vector<39x128xf32>
    %43 = arith.truncf %42 : vector<39x128xf32> to vector<39x128xbf16>
    %c0_24 = arith.constant 0 : index
    %c0_25 = arith.constant 0 : index
    %c0_26 = arith.constant 0 : index
    %44 = vector.load %arg5[%c0_24, %c0_25, %c0_26] : memref<3x128x128xbf16, #tpu.memory_space<vmem>>, vector<1x128x128xbf16>
    %45 = vector.shape_cast %44 : vector<1x128x128xbf16> to vector<128x128xbf16>
    %cst_27 = arith.constant dense<0.000000e+00> : vector<39x128xf32>
    %46 = tpu.matmul %43, %45, %cst_27 {dimension_numbers = #tpu.dot_dimension_numbers<[1], [0], [0], [1], [0, 0, 1, 1], [], []>} : vector<39x128xbf16>, vector<128x128xbf16>, vector<39x128xf32> -> vector<39x128xf32>
    %47 = arith.addf %40, %46 : vector<39x128xf32>
    %c0_28 = arith.constant 0 : index
    %c1 = arith.constant 1 : index
    %c0_29 = arith.constant 0 : index
    %48 = tpu.strided_load %arg8[%c0_28, %c1, %c0_29] {strides = array<i32: 1, 2, 1>} : memref<1x79x128xf32, #tpu.memory_space<vmem>>, vector<1x39x128xf32>
    %49 = vector.shape_cast %48 : vector<1x39x128xf32> to vector<39x128xf32>
    %50 = arith.truncf %49 : vector<39x128xf32> to vector<39x128xbf16>
    %c1_30 = arith.constant 1 : index
    %c0_31 = arith.constant 0 : index
    %c0_32 = arith.constant 0 : index
    %51 = vector.load %arg5[%c1_30, %c0_31, %c0_32] : memref<3x128x128xbf16, #tpu.memory_space<vmem>>, vector<1x128x128xbf16>
    %52 = vector.shape_cast %51 : vector<1x128x128xbf16> to vector<128x128xbf16>
    %cst_33 = arith.constant dense<0.000000e+00> : vector<39x128xf32>
    %53 = tpu.matmul %50, %52, %cst_33 {dimension_numbers = #tpu.dot_dimension_numbers<[1], [0], [0], [1], [0, 0, 1, 1], [], []>} : vector<39x128xbf16>, vector<128x128xbf16>, vector<39x128xf32> -> vector<39x128xf32>
    %54 = arith.addf %47, %53 : vector<39x128xf32>
    %c0_34 = arith.constant 0 : index
    %c2 = arith.constant 2 : index
    %c0_35 = arith.constant 0 : index
    %55 = tpu.strided_load %arg8[%c0_34, %c2, %c0_35] {strides = array<i32: 1, 2, 1>} : memref<1x79x128xf32, #tpu.memory_space<vmem>>, vector<1x39x128xf32>
    %56 = vector.shape_cast %55 : vector<1x39x128xf32> to vector<39x128xf32>
    %57 = arith.truncf %56 : vector<39x128xf32> to vector<39x128xbf16>
    %c2_36 = arith.constant 2 : index
    %c0_37 = arith.constant 0 : index
    %c0_38 = arith.constant 0 : index
    %58 = vector.load %arg5[%c2_36, %c0_37, %c0_38] : memref<3x128x128xbf16, #tpu.memory_space<vmem>>, vector<1x128x128xbf16>
    %59 = vector.shape_cast %58 : vector<1x128x128xbf16> to vector<128x128xbf16>
    %cst_39 = arith.constant dense<0.000000e+00> : vector<39x128xf32>
    %60 = tpu.matmul %57, %59, %cst_39 {dimension_numbers = #tpu.dot_dimension_numbers<[1], [0], [0], [1], [0, 0, 1, 1], [], []>} : vector<39x128xbf16>, vector<128x128xbf16>, vector<39x128xf32> -> vector<39x128xf32>
    %61 = arith.addf %54, %60 : vector<39x128xf32>
    %cst_40 = arith.constant 5.000000e-01 : f32
    %62 = vector.broadcast %cst_40 : f32 to vector<39x128xf32>
    %63 = arith.mulf %62, %61 : vector<39x128xf32>
    %cst_41 = arith.constant 0.707106769 : f32
    %64 = vector.broadcast %cst_41 : f32 to vector<39x128xf32>
    %65 = arith.mulf %61, %64 : vector<39x128xf32>
    %66 = math.erf %65 : vector<39x128xf32>
    %cst_42 = arith.constant 1.000000e+00 : f32
    %67 = vector.broadcast %cst_42 : f32 to vector<39x128xf32>
    %68 = arith.addf %67, %66 : vector<39x128xf32>
    %69 = arith.mulf %63, %68 : vector<39x128xf32>
    %c0_43 = arith.constant 0 : index
    %c0_44 = arith.constant 0 : index
    %c0_45 = arith.constant 0 : index
    %70 = vector.load %arg9[%c0_43, %c0_44, %c0_45] : memref<1x79x128xf32, #tpu.memory_space<vmem>>, vector<1x39x128xf32>
    %71 = vector.shape_cast %70 : vector<1x39x128xf32> to vector<39x128xf32>
    %72 = vector.shape_cast %69 : vector<39x128xf32> to vector<1x39x128xf32>
    tpu.vector_store %arg9[%c0_43, %c0_44, %c0_45], %72 {strides = array<i32>} : memref<1x79x128xf32, #tpu.memory_space<vmem>>, vector<1x39x128xf32>,
    %cst_46 = arith.constant 0.000000e+00 : f32
    %73 = vector.broadcast %cst_46 : f32 to vector<40x128xf32>
    %c0_47 = arith.constant 0 : index
    %c39 = arith.constant 39 : index
    %c0_48 = arith.constant 0 : index
    %74 = vector.load %arg9[%c0_47, %c39, %c0_48] : memref<1x79x128xf32, #tpu.memory_space<vmem>>, vector<1x40x128xf32>
    %75 = vector.shape_cast %74 : vector<1x40x128xf32> to vector<40x128xf32>
    %76 = vector.shape_cast %73 : vector<40x128xf32> to vector<1x40x128xf32>
    tpu.vector_store %arg9[%c0_47, %c39, %c0_48], %76 {strides = array<i32>} : memref<1x79x128xf32, #tpu.memory_space<vmem>>, vector<1x40x128xf32>,
    %cst_49 = arith.constant 0.000000e+00 : f32
    %77 = vector.broadcast %cst_49 : f32 to vector<19x128xf32>
    %c0_50 = arith.constant 0 : index
    %c0_51 = arith.constant 0 : index
    %c0_52 = arith.constant 0 : index
    %78 = tpu.strided_load %arg9[%c0_50, %c0_51, %c0_52] {strides = array<i32: 1, 2, 1>} : memref<1x79x128xf32, #tpu.memory_space<vmem>>, vector<1x19x128xf32>
    %79 = vector.shape_cast %78 : vector<1x19x128xf32> to vector<19x128xf32>
    %80 = arith.truncf %79 : vector<19x128xf32> to vector<19x128xbf16>
    %c0_53 = arith.constant 0 : index
    %c0_54 = arith.constant 0 : index
    %c0_55 = arith.constant 0 : index
    %81 = vector.load %arg6[%c0_53, %c0_54, %c0_55] : memref<3x128x128xbf16, #tpu.memory_space<vmem>>, vector<1x128x128xbf16>
    %82 = vector.shape_cast %81 : vector<1x128x128xbf16> to vector<128x128xbf16>
    %cst_56 = arith.constant dense<0.000000e+00> : vector<19x128xf32>
    %83 = tpu.matmul %80, %82, %cst_56 {dimension_numbers = #tpu.dot_dimension_numbers<[1], [0], [0], [1], [0, 0, 1, 1], [], []>} : vector<19x128xbf16>, vector<128x128xbf16>, vector<19x128xf32> -> vector<19x128xf32>
    %84 = arith.addf %77, %83 : vector<19x128xf32>
    %c0_57 = arith.constant 0 : index
    %c1_58 = arith.constant 1 : index
    %c0_59 = arith.constant 0 : index
    %85 = tpu.strided_load %arg9[%c0_57, %c1_58, %c0_59] {strides = array<i32: 1, 2, 1>} : memref<1x79x128xf32, #tpu.memory_space<vmem>>, vector<1x19x128xf32>
    %86 = vector.shape_cast %85 : vector<1x19x128xf32> to vector<19x128xf32>
    %87 = arith.truncf %86 : vector<19x128xf32> to vector<19x128xbf16>
    %c1_60 = arith.constant 1 : index
    %c0_61 = arith.constant 0 : index
    %c0_62 = arith.constant 0 : index
    %88 = vector.load %arg6[%c1_60, %c0_61, %c0_62] : memref<3x128x128xbf16, #tpu.memory_space<vmem>>, vector<1x128x128xbf16>
    %89 = vector.shape_cast %88 : vector<1x128x128xbf16> to vector<128x128xbf16>
    %cst_63 = arith.constant dense<0.000000e+00> : vector<19x128xf32>
    %90 = tpu.matmul %87, %89, %cst_63 {dimension_numbers = #tpu.dot_dimension_numbers<[1], [0], [0], [1], [0, 0, 1, 1], [], []>} : vector<19x128xbf16>, vector<128x128xbf16>, vector<19x128xf32> -> vector<19x128xf32>
    %91 = arith.addf %84, %90 : vector<19x128xf32>
    %c0_64 = arith.constant 0 : index
    %c2_65 = arith.constant 2 : index
    %c0_66 = arith.constant 0 : index
    %92 = tpu.strided_load %arg9[%c0_64, %c2_65, %c0_66] {strides = array<i32: 1, 2, 1>} : memref<1x79x128xf32, #tpu.memory_space<vmem>>, vector<1x19x128xf32>
    %93 = vector.shape_cast %92 : vector<1x19x128xf32> to vector<19x128xf32>
    %94 = arith.truncf %93 : vector<19x128xf32> to vector<19x128xbf16>
    %c2_67 = arith.constant 2 : index
    %c0_68 = arith.constant 0 : index
    %c0_69 = arith.constant 0 : index
    %95 = vector.load %arg6[%c2_67, %c0_68, %c0_69] : memref<3x128x128xbf16, #tpu.memory_space<vmem>>, vector<1x128x128xbf16>
    %96 = vector.shape_cast %95 : vector<1x128x128xbf16> to vector<128x128xbf16>
    %cst_70 = arith.constant dense<0.000000e+00> : vector<19x128xf32>
    %97 = tpu.matmul %94, %96, %cst_70 {dimension_numbers = #tpu.dot_dimension_numbers<[1], [0], [0], [1], [0, 0, 1, 1], [], []>} : vector<19x128xbf16>, vector<128x128xbf16>, vector<19x128xf32> -> vector<19x128xf32>
    %98 = arith.addf %91, %97 : vector<19x128xf32>
    %cst_71 = arith.constant 5.000000e-01 : f32
    %99 = vector.broadcast %cst_71 : f32 to vector<19x128xf32>
    %100 = arith.mulf %99, %98 : vector<19x128xf32>
    %cst_72 = arith.constant 0.707106769 : f32
    %101 = vector.broadcast %cst_72 : f32 to vector<19x128xf32>
    %102 = arith.mulf %98, %101 : vector<19x128xf32>
    %103 = math.erf %102 : vector<19x128xf32>
    %cst_73 = arith.constant 1.000000e+00 : f32
    %104 = vector.broadcast %cst_73 : f32 to vector<19x128xf32>
    %105 = arith.addf %104, %103 : vector<19x128xf32>
    %106 = arith.mulf %100, %105 : vector<19x128xf32>
    %c0_74 = arith.constant 0 : index
    %c0_75 = arith.constant 0 : index
    %c0_76 = arith.constant 0 : index
    %107 = vector.load %arg10[%c0_74, %c0_75, %c0_76] : memref<1x79x128xf32, #tpu.memory_space<vmem>>, vector<1x19x128xf32>
    %108 = vector.shape_cast %107 : vector<1x19x128xf32> to vector<19x128xf32>
    %109 = vector.shape_cast %106 : vector<19x128xf32> to vector<1x19x128xf32>
    tpu.vector_store %arg10[%c0_74, %c0_75, %c0_76], %109 {strides = array<i32>} : memref<1x79x128xf32, #tpu.memory_space<vmem>>, vector<1x19x128xf32>,
    %cst_77 = arith.constant 0.000000e+00 : f32
    %110 = vector.broadcast %cst_77 : f32 to vector<60x128xf32>
    %c0_78 = arith.constant 0 : index
    %c19 = arith.constant 19 : index
    %c0_79 = arith.constant 0 : index
    %111 = vector.load %arg10[%c0_78, %c19, %c0_79] : memref<1x79x128xf32, #tpu.memory_space<vmem>>, vector<1x60x128xf32>
    %112 = vector.shape_cast %111 : vector<1x60x128xf32> to vector<60x128xf32>
    %113 = vector.shape_cast %110 : vector<60x128xf32> to vector<1x60x128xf32>
    tpu.vector_store %arg10[%c0_78, %c19, %c0_79], %113 {strides = array<i32>} : memref<1x79x128xf32, #tpu.memory_space<vmem>>, vector<1x60x128xf32>,
    %cst_80 = arith.constant 0.000000e+00 : f32
    %114 = vector.broadcast %cst_80 : f32 to vector<9x128xf32>
    %c0_81 = arith.constant 0 : index
    %c0_82 = arith.constant 0 : index
    %c0_83 = arith.constant 0 : index
    %115 = tpu.strided_load %arg10[%c0_81, %c0_82, %c0_83] {strides = array<i32: 1, 2, 1>} : memref<1x79x128xf32, #tpu.memory_space<vmem>>, vector<1x9x128xf32>
    %116 = vector.shape_cast %115 : vector<1x9x128xf32> to vector<9x128xf32>
    %117 = arith.truncf %116 : vector<9x128xf32> to vector<9x128xbf16>
    %c0_84 = arith.constant 0 : index
    %c0_85 = arith.constant 0 : index
    %c0_86 = arith.constant 0 : index
    %118 = vector.load %arg7[%c0_84, %c0_85, %c0_86] : memref<2x128x128xbf16, #tpu.memory_space<vmem>>, vector<1x128x128xbf16>
    %119 = vector.shape_cast %118 : vector<1x128x128xbf16> to vector<128x128xbf16>
    %cst_87 = arith.constant dense<0.000000e+00> : vector<9x128xf32>
    %120 = tpu.matmul %117, %119, %cst_87 {dimension_numbers = #tpu.dot_dimension_numbers<[1], [0], [0], [1], [0, 0, 1, 1], [], []>} : vector<9x128xbf16>, vector<128x128xbf16>, vector<9x128xf32> -> vector<9x128xf32>
    %121 = arith.addf %114, %120 : vector<9x128xf32>
    %c0_88 = arith.constant 0 : index
    %c1_89 = arith.constant 1 : index
    %c0_90 = arith.constant 0 : index
    %122 = tpu.strided_load %arg10[%c0_88, %c1_89, %c0_90] {strides = array<i32: 1, 2, 1>} : memref<1x79x128xf32, #tpu.memory_space<vmem>>, vector<1x9x128xf32>
    %123 = vector.shape_cast %122 : vector<1x9x128xf32> to vector<9x128xf32>
    %124 = arith.truncf %123 : vector<9x128xf32> to vector<9x128xbf16>
    %c1_91 = arith.constant 1 : index
    %c0_92 = arith.constant 0 : index
    %c0_93 = arith.constant 0 : index
    %125 = vector.load %arg7[%c1_91, %c0_92, %c0_93] : memref<2x128x128xbf16, #tpu.memory_space<vmem>>, vector<1x128x128xbf16>
    %126 = vector.shape_cast %125 : vector<1x128x128xbf16> to vector<128x128xbf16>
    %cst_94 = arith.constant dense<0.000000e+00> : vector<9x128xf32>
    %127 = tpu.matmul %124, %126, %cst_94 {dimension_numbers = #tpu.dot_dimension_numbers<[1], [0], [0], [1], [0, 0, 1, 1], [], []>} : vector<9x128xbf16>, vector<128x128xbf16>, vector<9x128xf32> -> vector<9x128xf32>
    %128 = arith.addf %121, %127 : vector<9x128xf32>
    %cst_95 = arith.constant 5.000000e-01 : f32
    %129 = vector.broadcast %cst_95 : f32 to vector<9x128xf32>
    %130 = arith.mulf %129, %128 : vector<9x128xf32>
    %cst_96 = arith.constant 0.707106769 : f32
    %131 = vector.broadcast %cst_96 : f32 to vector<9x128xf32>
    %132 = arith.mulf %128, %131 : vector<9x128xf32>
    %133 = math.erf %132 : vector<9x128xf32>
    %cst_97 = arith.constant 1.000000e+00 : f32
    %134 = vector.broadcast %cst_97 : f32 to vector<9x128xf32>
    %135 = arith.addf %134, %133 : vector<9x128xf32>
    %136 = arith.mulf %130, %135 : vector<9x128xf32>
    %c0_98 = arith.constant 0 : index
    %c0_99 = arith.constant 0 : index
    %c0_100 = arith.constant 0 : index
    %137 = vector.load %arg11[%c0_98, %c0_99, %c0_100] : memref<1x79x128xf32, #tpu.memory_space<vmem>>, vector<1x9x128xf32>
    %138 = vector.shape_cast %137 : vector<1x9x128xf32> to vector<9x128xf32>
    %139 = vector.shape_cast %136 : vector<9x128xf32> to vector<1x9x128xf32>
    tpu.vector_store %arg11[%c0_98, %c0_99, %c0_100], %139 {strides = array<i32>} : memref<1x79x128xf32, #tpu.memory_space<vmem>>, vector<1x9x128xf32>,
    %cst_101 = arith.constant 0.000000e+00 : f32
    %140 = vector.broadcast %cst_101 : f32 to vector<70x128xf32>
    %c0_102 = arith.constant 0 : index
    %c9 = arith.constant 9 : index
    %c0_103 = arith.constant 0 : index
    %141 = vector.load %arg11[%c0_102, %c9, %c0_103] : memref<1x79x128xf32, #tpu.memory_space<vmem>>, vector<1x70x128xf32>
    %142 = vector.shape_cast %141 : vector<1x70x128xf32> to vector<70x128xf32>
    %143 = vector.shape_cast %140 : vector<70x128xf32> to vector<1x70x128xf32>
    tpu.vector_store %arg11[%c0_102, %c9, %c0_103], %143 {strides = array<i32>} : memref<1x79x128xf32, #tpu.memory_space<vmem>>, vector<1x70x128xf32>,
    return
  }
  func.func @transform_0(%arg0: i32) -> (i32, i32, i32) {
    %c0_i32 = arith.constant 0 : i32
    %c0_i32_0 = arith.constant 0 : i32
    %c0_i32_1 = arith.constant 0 : i32
    return %arg0, %c0_i32, %c0_i32_0 : i32, i32, i32
  }
  func.func @transform_1(%arg0: i32) -> (i32, i32) {
    %c0_i32 = arith.constant 0 : i32
    %c0_i32_0 = arith.constant 0 : i32
    %c0_i32_1 = arith.constant 0 : i32
    return %c0_i32, %c0_i32_0 : i32, i32
  }
  func.func @transform_2(%arg0: i32) -> (i32, i32) {
    %c0_i32 = arith.constant 0 : i32
    %c0_i32_0 = arith.constant 0 : i32
    %c0_i32_1 = arith.constant 0 : i32
    return %c0_i32, %c0_i32_0 : i32, i32
  }
  func.func @transform_3(%arg0: i32) -> (i32, i32) {
    %c0_i32 = arith.constant 0 : i32
    %c0_i32_0 = arith.constant 0 : i32
    %c0_i32_1 = arith.constant 0 : i32
    return %c0_i32, %c0_i32_0 : i32, i32
  }
  func.func @transform_4(%arg0: i32) -> (i32, i32, i32) {
    %c0_i32 = arith.constant 0 : i32
    %c0_i32_0 = arith.constant 0 : i32
    %c0_i32_1 = arith.constant 0 : i32
    %c0_i32_2 = arith.constant 0 : i32
    return %c0_i32, %c0_i32_0, %c0_i32_1 : i32, i32, i32
  }
  func.func @transform_5(%arg0: i32) -> (i32, i32, i32) {
    %c0_i32 = arith.constant 0 : i32
    %c0_i32_0 = arith.constant 0 : i32
    %c0_i32_1 = arith.constant 0 : i32
    %c0_i32_2 = arith.constant 0 : i32
    return %c0_i32, %c0_i32_0, %c0_i32_1 : i32, i32, i32
  }
  func.func @transform_6(%arg0: i32) -> (i32, i32, i32) {
    %c0_i32 = arith.constant 0 : i32
    %c0_i32_0 = arith.constant 0 : i32
    %c0_i32_1 = arith.constant 0 : i32
    %c0_i32_2 = arith.constant 0 : i32
    return %c0_i32, %c0_i32_0, %c0_i32_1 : i32, i32, i32
  }
  func.func @transform_7(%arg0: i32) -> (i32, i32, i32) {
    %c0_i32 = arith.constant 0 : i32
    %c0_i32_0 = arith.constant 0 : i32
    %c0_i32_1 = arith.constant 0 : i32
    return %arg0, %c0_i32, %c0_i32_0 : i32, i32, i32
  }
  func.func @transform_8(%arg0: i32) -> (i32, i32, i32) {
    %c0_i32 = arith.constant 0 : i32
    %c0_i32_0 = arith.constant 0 : i32
    %c0_i32_1 = arith.constant 0 : i32
    return %arg0, %c0_i32, %c0_i32_0 : i32, i32, i32
  }
  func.func @transform_9(%arg0: i32) -> (i32, i32, i32) {
    %c0_i32 = arith.constant 0 : i32
    %c0_i32_0 = arith.constant 0 : i32
    %c0_i32_1 = arith.constant 0 : i32
    return %arg0, %c0_i32, %c0_i32_0 : i32, i32, i32
  }
  func.func @transform_10(%arg0: i32) -> (i32, i32, i32) {
    %c0_i32 = arith.constant 0 : i32
    %c0_i32_0 = arith.constant 0 : i32
    %c0_i32_1 = arith.constant 0 : i32
    return %arg0, %c0_i32, %c0_i32_0 : i32, i32, i32
  }
}

</mosaic_0001>

<llo_original>
// kernel: wavlm_feature_extractor_layers.1
$region0: #{wavlm_feature_extractor_layers.1}
  #allocation0 [shape = 'u32[]', space=smem, size = 0x4, offset = 0x4, fixed_abs, tag = 'smem constant byte address 0x4 - core index']
  #allocation1 [shape = 'u32[72,128]{1,0:T(1,128)}', space=vmem, size = 0x9000, scoped, tag = 'internal scratch']
  %s0 = inlined_call_operand.vmem [shape: bf16[2,79,10], index: 0, kind: input, shape index: {}]
  %s1 = inlined_call_operand.vmem [shape: bf16[10,128], index: 1, kind: input, shape index: {}]
  %s2 = inlined_call_operand.vmem [shape: f32[1,128], index: 2, kind: input, shape index: {}]
  %s3 = inlined_call_operand.vmem [shape: f32[1,128], index: 3, kind: input, shape index: {}]
  %s4 = inlined_call_operand.vmem [shape: bf16[3,128,128], index: 4, kind: input, shape index: {}]
  %s5 = inlined_call_operand.vmem [shape: bf16[3,128,128], index: 5, kind: input, shape index: {}]
  %s6 = inlined_call_operand.vmem [shape: bf16[2,128,128], index: 6, kind: input, shape index: {}]
  %s7 = inlined_call_operand.vmem [shape: f32[2,79,128], index: 7, kind: output, shape index: {0}]
  %s8 = inlined_call_operand.vmem [shape: f32[2,79,128], index: 8, kind: output, shape index: {1}]
  %s9 = inlined_call_operand.vmem [shape: f32[2,79,128], index: 9, kind: output, shape index: {2}]
  %s10 = inlined_call_operand.vmem [shape: f32[2,79,128], index: 10, kind: output, shape index: {3}]
  %11 = xla_tuple %s7, %s8, %s9, %s10
  %s12 = sld [smem:[#allocation0]]
  $region85: #{wavlm_feature_extractor_layers.1} parent=0
    _
  %s14 = ssub.s32 1, %s12
  %s15 = scalar_select 0, %s14, %s12
  loop: start=0, step=1, limit=4
  $region2: #{wavlm_feature_extractor_layers.1} parent=0 // loop_pre_header
    _
  $region3: #{wavlm_feature_extractor_layers.1} parent=0 // loop_header
    %s17 = sphi 0, %s21
    %p18 = scmp.ge.s32.totalorder %s17, 4
    %s27 = sphi 0, %s29
    %s30 = sphi 0, %s27
    %s31 = sphi 0, %s30
    %s47 = sphi 0, %s31
    %s51 = sphi 0, %s51
    %s53 = sphi 0, %s51
    %s54 = sphi 0, %s53
    %s68 = sphi 0, %s54
    %s72 = sphi 0, %s72
    %s74 = sphi 0, %s72
    %s75 = sphi 0, %s74
    %s89 = sphi 0, %s75
    %s93 = sphi 0, %s93
    %s95 = sphi 0, %s93
    %s96 = sphi 0, %s95
    %s110 = sphi 0, %s96
    %s114 = sphi 0, %s114
    %s116 = sphi 0, %s114
    %s117 = sphi 0, %s116
    %s131 = sphi 0, %s117
    %s135 = sphi 0, %s135
    %s137 = sphi 0, %s135
    %s138 = sphi 0, %s137
    %s152 = sphi 0, %s138
    %s156 = sphi 0, %s156
    %s158 = sphi 0, %s156
    %s159 = sphi 0, %s158
    %s173 = sphi 0, %s159
    %s179 = sphi 0, %s181
    %s182 = sphi 0, %s179
    %s183 = sphi 0, %s182
    %s199 = sphi 0, %s183
    %s205 = sphi 0, %s207
    %s208 = sphi 0, %s205
    %s209 = sphi 0, %s208
    %s225 = sphi 0, %s209
    %s231 = sphi 0, %s233
    %s234 = sphi 0, %s231
    %s235 = sphi 0, %s234
    %s251 = sphi 0, %s235
    %s257 = sphi 0, %s259
    %s260 = sphi 0, %s257
    %s261 = sphi 0, %s260
    %s277 = sphi 0, %s261
  $region4: #{wavlm_feature_extractor_layers.1} parent=0 // loop_header_branch
    %20 = sbr.rel (%p18) target = $region8
  $region5: #{wavlm_feature_extractor_layers.1} parent=0 // loop_body
    %s22 = ssub.s32 %s17, 1
    %s23 = ssub.s32 %s17, 2
    %s24 = sadd.s32 %s17, 1
    %s25 = ssub.s32 %s17, %s24
    %p26 = scmp.eq.s32.totalorder %s25, 0
    %s28 = sadd.s32 %s27, 1
    %s29 = scalar_select %p26, %s27, %s28
    %p32 = pneg %p26
    %p33 = scmp.eq.s32.totalorder %s17, 1
    %p34 = por %p32, %p33
    %p35 = scmp.ne.s32.totalorder %s27, %s30
    %p36 = scmp.eq.s32.totalorder %s17, 0
    %p37 = por %p35, %p36
    %p38 = scmp.ne.s32.totalorder %s27, %s30
    %p39 = scmp.eq.s32.totalorder %s22, 1
    %p40 = por %p38, %p39
    %p41 = scmp.ne.s32.totalorder %s30, %s31
    %p42 = scmp.eq.s32.totalorder %s22, 0
    %p43 = por %p41, %p42
    %p44 = scmp.ne.s32.totalorder %s30, %s31
    %p45 = scmp.eq.s32.totalorder %s23, 1
    %p46 = por %p44, %p45
    %p48 = scmp.ne.s32.totalorder %s31, %s47
    %p49 = scmp.eq.s32.totalorder %s23, 0
    %p50 = por %p48, %p49
    %s52 = sadd.s32 %s51, 1
    %p55 = scmp.eq.s32.totalorder %s17, 1
    %p56 = scmp.ne.s32.totalorder %s51, %s53
    %p57 = scmp.eq.s32.totalorder %s17, 0
    %p58 = por %p56, %p57
    %p59 = scmp.ne.s32.totalorder %s51, %s53
    %p60 = scmp.eq.s32.totalorder %s22, 1
    %p61 = por %p59, %p60
    %p62 = scmp.ne.s32.totalorder %s53, %s54
    %p63 = scmp.eq.s32.totalorder %s22, 0
    %p64 = por %p62, %p63
    %p65 = scmp.ne.s32.totalorder %s53, %s54
    %p66 = scmp.eq.s32.totalorder %s23, 1
    %p67 = por %p65, %p66
    %p69 = scmp.ne.s32.totalorder %s54, %s68
    %p70 = scmp.eq.s32.totalorder %s23, 0
    %p71 = por %p69, %p70
    %s73 = sadd.s32 %s72, 1
    %p76 = scmp.eq.s32.totalorder %s17, 1
    %p77 = scmp.ne.s32.totalorder %s72, %s74
    %p78 = scmp.eq.s32.totalorder %s17, 0
    %p79 = por %p77, %p78
    %p80 = scmp.ne.s32.totalorder %s72, %s74
    %p81 = scmp.eq.s32.totalorder %s22, 1
    %p82 = por %p80, %p81
    %p83 = scmp.ne.s32.totalorder %s74, %s75
    %p84 = scmp.eq.s32.totalorder %s22, 0
    %p85 = por %p83, %p84
    %p86 = scmp.ne.s32.totalorder %s74, %s75
    %p87 = scmp.eq.s32.totalorder %s23, 1
    %p88 = por %p86, %p87
    %p90 = scmp.ne.s32.totalorder %s75, %s89
    %p91 = scmp.eq.s32.totalorder %s23, 0
    %p92 = por %p90, %p91
    %s94 = sadd.s32 %s93, 1
    %p97 = scmp.eq.s32.totalorder %s17, 1
    %p98 = scmp.ne.s32.totalorder %s93, %s95
    %p99 = scmp.eq.s32.totalorder %s17, 0
    %p100 = por %p98, %p99
    %p101 = scmp.ne.s32.totalorder %s93, %s95
    %p102 = scmp.eq.s32.totalorder %s22, 1
    %p103 = por %p101, %p102
    %p104 = scmp.ne.s32.totalorder %s95, %s96
    %p105 = scmp.eq.s32.totalorder %s22, 0
    %p106 = por %p104, %p105
    %p107 = scmp.ne.s32.totalorder %s95, %s96
    %p108 = scmp.eq.s32.totalorder %s23, 1
    %p109 = por %p107, %p108
    %p111 = scmp.ne.s32.totalorder %s96, %s110
    %p112 = scmp.eq.s32.totalorder %s23, 0
    %p113 = por %p111, %p112
    %s115 = sadd.s32 %s114, 1
    %p118 = scmp.eq.s32.totalorder %s17, 1
    %p119 = scmp.ne.s32.totalorder %s114, %s116
    %p120 = scmp.eq.s32.totalorder %s17, 0
    %p121 = por %p119, %p120
    %p122 = scmp.ne.s32.totalorder %s114, %s116
    %p123 = scmp.eq.s32.totalorder %s22, 1
    %p124 = por %p122, %p123
    %p125 = scmp.ne.s32.totalorder %s116, %s117
    %p126 = scmp.eq.s32.totalorder %s22, 0
    %p127 = por %p125, %p126
    %p128 = scmp.ne.s32.totalorder %s116, %s117
    %p129 = scmp.eq.s32.totalorder %s23, 1
    %p130 = por %p128, %p129
    %p132 = scmp.ne.s32.totalorder %s117, %s131
    %p133 = scmp.eq.s32.totalorder %s23, 0
    %p134 = por %p132, %p133
    %s136 = sadd.s32 %s135, 1
    %p139 = scmp.eq.s32.totalorder %s17, 1
    %p140 = scmp.ne.s32.totalorder %s135, %s137
    %p141 = scmp.eq.s32.totalorder %s17, 0
    %p142 = por %p140, %p141
    %p143 = scmp.ne.s32.totalorder %s135, %s137
    %p144 = scmp.eq.s32.totalorder %s22, 1
    %p145 = por %p143, %p144
    %p146 = scmp.ne.s32.totalorder %s137, %s138
    %p147 = scmp.eq.s32.totalorder %s22, 0
    %p148 = por %p146, %p147
    %p149 = scmp.ne.s32.totalorder %s137, %s138
    %p150 = scmp.eq.s32.totalorder %s23, 1
    %p151 = por %p149, %p150
    %p153 = scmp.ne.s32.totalorder %s138, %s152
    %p154 = scmp.eq.s32.totalorder %s23, 0
    %p155 = por %p153, %p154
    %s157 = sadd.s32 %s156, 1
    %p160 = scmp.eq.s32.totalorder %s17, 1
    %p161 = scmp.ne.s32.totalorder %s156, %s158
    %p162 = scmp.eq.s32.totalorder %s17, 0
    %p163 = por %p161, %p162
    %p164 = scmp.ne.s32.totalorder %s156, %s158
    %p165 = scmp.eq.s32.totalorder %s22, 1
    %p166 = por %p164, %p165
    %p167 = scmp.ne.s32.totalorder %s158, %s159
    %p168 = scmp.eq.s32.totalorder %s22, 0
    %p169 = por %p167, %p168
    %p170 = scmp.ne.s32.totalorder %s158, %s159
    %p171 = scmp.eq.s32.totalorder %s23, 1
    %p172 = por %p170, %p171
    %p174 = scmp.ne.s32.totalorder %s159, %s173
    %p175 = scmp.eq.s32.totalorder %s23, 0
    %p176 = por %p174, %p175
    %s177 = ssub.s32 %s17, %s24
    %p178 = scmp.eq.s32.totalorder %s177, 0
    %s180 = sadd.s32 %s179, 1
    %s181 = scalar_select %p178, %s179, %s180
    %p184 = pneg %p178
    %p185 = scmp.eq.s32.totalorder %s17, 1
    %p186 = por %p184, %p185
    %p187 = scmp.ne.s32.totalorder %s179, %s182
    %p188 = scmp.eq.s32.totalorder %s17, 0
    %p189 = por %p187, %p188
    %p190 = scmp.ne.s32.totalorder %s179, %s182
    %p191 = scmp.eq.s32.totalorder %s22, 1
    %p192 = por %p190, %p191
    %p193 = scmp.ne.s32.totalorder %s182, %s183
    %p194 = scmp.eq.s32.totalorder %s22, 0
    %p195 = por %p193, %p194
    %p196 = scmp.ne.s32.totalorder %s182, %s183
    %p197 = scmp.eq.s32.totalorder %s23, 1
    %p198 = por %p196, %p197
    %p200 = scmp.ne.s32.totalorder %s183, %s199
    %p201 = scmp.eq.s32.totalorder %s23, 0
    %p202 = por %p200, %p201
    %s203 = ssub.s32 %s17, %s24
    %p204 = scmp.eq.s32.totalorder %s203, 0
    %s206 = sadd.s32 %s205, 1
    %s207 = scalar_select %p204, %s205, %s206
    %p210 = pneg %p204
    %p211 = scmp.eq.s32.totalorder %s17, 1
    %p212 = por %p210, %p211
    %p213 = scmp.ne.s32.totalorder %s205, %s208
    %p214 = scmp.eq.s32.totalorder %s17, 0
    %p215 = por %p213, %p214
    %p216 = scmp.ne.s32.totalorder %s205, %s208
    %p217 = scmp.eq.s32.totalorder %s22, 1
    %p218 = por %p216, %p217
    %p219 = scmp.ne.s32.totalorder %s208, %s209
    %p220 = scmp.eq.s32.totalorder %s22, 0
    %p221 = por %p219, %p220
    %p222 = scmp.ne.s32.totalorder %s208, %s209
    %p223 = scmp.eq.s32.totalorder %s23, 1
    %p224 = por %p222, %p223
    %p226 = scmp.ne.s32.totalorder %s209, %s225
    %p227 = scmp.eq.s32.totalorder %s23, 0
    %p228 = por %p226, %p227
    %s229 = ssub.s32 %s17, %s24
    %p230 = scmp.eq.s32.totalorder %s229, 0
    %s232 = sadd.s32 %s231, 1
    %s233 = scalar_select %p230, %s231, %s232
    %p236 = pneg %p230
    %p237 = scmp.eq.s32.totalorder %s17, 1
    %p238 = por %p236, %p237
    %p239 = scmp.ne.s32.totalorder %s231, %s234
    %p240 = scmp.eq.s32.totalorder %s17, 0
    %p241 = por %p239, %p240
    %p242 = scmp.ne.s32.totalorder %s231, %s234
    %p243 = scmp.eq.s32.totalorder %s22, 1
    %p244 = por %p242, %p243
    %p245 = scmp.ne.s32.totalorder %s234, %s235
    %p246 = scmp.eq.s32.totalorder %s22, 0
    %p247 = por %p245, %p246
    %p248 = scmp.ne.s32.totalorder %s234, %s235
    %p249 = scmp.eq.s32.totalorder %s23, 1
    %p250 = por %p248, %p249
    %p252 = scmp.ne.s32.totalorder %s235, %s251
    %p253 = scmp.eq.s32.totalorder %s23, 0
    %p254 = por %p252, %p253
    %s255 = ssub.s32 %s17, %s24
    %p256 = scmp.eq.s32.totalorder %s255, 0
    %s258 = sadd.s32 %s257, 1
    %s259 = scalar_select %p256, %s257, %s258
    %p262 = pneg %p256
    %p263 = scmp.eq.s32.totalorder %s17, 1
    %p264 = por %p262, %p263
    %p265 = scmp.ne.s32.totalorder %s257, %s260
    %p266 = scmp.eq.s32.totalorder %s17, 0
    %p267 = por %p265, %p266
    %p268 = scmp.ne.s32.totalorder %s257, %s260
    %p269 = scmp.eq.s32.totalorder %s22, 1
    %p270 = por %p268, %p269
    %p271 = scmp.ne.s32.totalorder %s260, %s261
    %p272 = scmp.eq.s32.totalorder %s22, 0
    %p273 = por %p271, %p272
    %p274 = scmp.ne.s32.totalorder %s260, %s261
    %p275 = scmp.eq.s32.totalorder %s23, 1
    %p276 = por %p274, %p275
    %p278 = scmp.ne.s32.totalorder %s261, %s277
    %p279 = scmp.eq.s32.totalorder %s23, 0
    %p280 = por %p278, %p279
    %p281 = scmp.le.s32.totalorder 1, %s17
    %p282 = scmp.lt.s32.totalorder %s17, 3
    %p283 = pnand %p281, %p282
    %p284 = pneg %p283
    // Predicated region
    $region9: #{wavlm_feature_extractor_layers.1} parent=5 // pred_check
      _
    $region10: #{wavlm_feature_extractor_layers.1} parent=5 // pred_check_branch
      %286 = sbr.rel (%p283) target = $region12
    $region11: #{wavlm_feature_extractor_layers.1} parent=5 // pred_region
      %s287 = ssub.s32 %s17, 1
      // Predicated region
      $region13: #{wavlm_feature_extractor_layers.1} parent=11 // pred_check
        %p288 = pneg %p64
      $region14: #{wavlm_feature_extractor_layers.1} parent=11 // pred_check_branch
        %290 = sbr.rel (%p288) target = $region16
      $region15: #{wavlm_feature_extractor_layers.1} parent=11 // pred_region
        _
      $region16: #{wavlm_feature_extractor_layers.1} parent=11 // pred_fallthru
        _
      // Predicated region
      $region17: #{wavlm_feature_extractor_layers.1} parent=11 // pred_check
        %p291 = pneg %p85
      $region18: #{wavlm_feature_extractor_layers.1} parent=11 // pred_check_branch
        %293 = sbr.rel (%p291) target = $region20
      $region19: #{wavlm_feature_extractor_layers.1} parent=11 // pred_region
        _
      $region20: #{wavlm_feature_extractor_layers.1} parent=11 // pred_fallthru
        _
      // Predicated region
      $region21: #{wavlm_feature_extractor_layers.1} parent=11 // pred_check
        %p294 = pneg %p106
      $region22: #{wavlm_feature_extractor_layers.1} parent=11 // pred_check_branch
        %296 = sbr.rel (%p294) target = $region24
      $region23: #{wavlm_feature_extractor_layers.1} parent=11 // pred_region
        _
      $region24: #{wavlm_feature_extractor_layers.1} parent=11 // pred_fallthru
        _
      // Predicated region
      $region25: #{wavlm_feature_extractor_layers.1} parent=11 // pred_check
        %p297 = pneg %p127
      $region26: #{wavlm_feature_extractor_layers.1} parent=11 // pred_check_branch
        %299 = sbr.rel (%p297) target = $region28
      $region27: #{wavlm_feature_extractor_layers.1} parent=11 // pred_region
        _
      $region28: #{wavlm_feature_extractor_layers.1} parent=11 // pred_fallthru
        _
      // Predicated region
      $region29: #{wavlm_feature_extractor_layers.1} parent=11 // pred_check
        %p300 = pneg %p148
      $region30: #{wavlm_feature_extractor_layers.1} parent=11 // pred_check_branch
        %302 = sbr.rel (%p300) target = $region32
      $region31: #{wavlm_feature_extractor_layers.1} parent=11 // pred_region
        _
      $region32: #{wavlm_feature_extractor_layers.1} parent=11 // pred_fallthru
        _
      // Predicated region
      $region33: #{wavlm_feature_extractor_layers.1} parent=11 // pred_check
        %p303 = pneg %p169
      $region34: #{wavlm_feature_extractor_layers.1} parent=11 // pred_check_branch
        %305 = sbr.rel (%p303) target = $region36
      $region35: #{wavlm_feature_extractor_layers.1} parent=11 // pred_region
        _
      $region36: #{wavlm_feature_extractor_layers.1} parent=11 // pred_fallthru
        _
    $region12: #{wavlm_feature_extractor_layers.1} parent=5 // pred_fallthru
      _
    %p306 = scmp.lt.s32.totalorder %s17, 2
    // Predicated region
    $region37: #{wavlm_feature_extractor_layers.1} parent=5 // pred_check
      %p307 = pneg %p306
    $region38: #{wavlm_feature_extractor_layers.1} parent=5 // pred_check_branch
      %309 = sbr.rel (%p307) target = $region40
    $region39: #{wavlm_feature_extractor_layers.1} parent=5 // pred_region
      // Predicated region
      $region41: #{wavlm_feature_extractor_layers.1} parent=39 // pred_check
        %p310 = pneg %p37
      $region42: #{wavlm_feature_extractor_layers.1} parent=39 // pred_check_branch
        %312 = sbr.rel (%p310) target = $region44
      $region43: #{wavlm_feature_extractor_layers.1} parent=39 // pred_region
        %p313 = scmp.lt.s32.totalorder %s17, 1
        %s314 = scalar_select %p313, %s17, 1
        %s315 = smul.addr %s314, 10
        %s316 = smul.addr %s315, 4
        %s317 = scalar_lea.vmem %s0, %s316
      $region44: #{wavlm_feature_extractor_layers.1} parent=39 // pred_fallthru
        _
    $region40: #{wavlm_feature_extractor_layers.1} parent=5 // pred_fallthru
      _
    %p318 = scmp.le.s32.totalorder 1, %s17
    %p319 = scmp.lt.s32.totalorder %s17, 3
    %p320 = pnand %p318, %p319
    %p321 = pneg %p320
    // Predicated region
    $region45: #{wavlm_feature_extractor_layers.1} parent=5 // pred_check
      _
    $region46: #{wavlm_feature_extractor_layers.1} parent=5 // pred_check_branch
      %323 = sbr.rel (%p320) target = $region48
    $region47: #{wavlm_feature_extractor_layers.1} parent=5 // pred_region
      %s324 = ssub.s32 %s17, 1
      %p325 = scmp.lt.s32.totalorder %s22, 1
      %s326 = scalar_select %p325, %s22, 1
      %s327 = smul.addr %s326, 10
      %s328 = smul.addr %s327, 4
      %s329 = scalar_lea.vmem %s0, %s328
      %p330 = pneg %p43
      %p331 = pneg %p40
      %p332 = pneg %p64
      %p333 = pneg %p61
      %p334 = pneg %p85
      %p335 = pneg %p82
      %p336 = pneg %p106
      %p337 = pneg %p103
      %p338 = pneg %p127
      %p339 = pneg %p124
      %p340 = pneg %p148
      %p341 = pneg %p145
      %p342 = pneg %p169
      %p343 = pneg %p166
      %p344 = pneg %p195
      %p345 = pneg %p192
      %p346 = scmp.lt.s32.totalorder %s22, 1
      %s347 = scalar_select %p346, %s22, 1
      %s348 = smul.addr %s347, 10
      %s349 = smul.addr %s348, 8
      %s350 = scalar_lea.vmem %s7, %s349
      %p351 = pneg %p221
      %p352 = pneg %p218
      %p353 = scmp.lt.s32.totalorder %s22, 1
      %s354 = scalar_select %p353, %s22, 1
      %s355 = smul.addr %s354, 10
      %s356 = smul.addr %s355, 8
      %s357 = scalar_lea.vmem %s8, %s356
      %p358 = pneg %p247
      %p359 = pneg %p244
      %p360 = scmp.lt.s32.totalorder %s22, 1
      %s361 = scalar_select %p360, %s22, 1
      %s362 = smul.addr %s361, 10
      %s363 = smul.addr %s362, 8
      %s364 = scalar_lea.vmem %s9, %s363
      %p365 = pneg %p273
      %p366 = pneg %p270
      %p367 = scmp.lt.s32.totalorder %s22, 1
      %s368 = scalar_select %p367, %s22, 1
      %s369 = smul.addr %s368, 10
      %s370 = smul.addr %s369, 8
      %s371 = scalar_lea.vmem %s10, %s370
      %p372 = scmp.lt.s32.totalorder %s22, 1
      %s373 = scalar_select %p372, %s22, 1
      %s374 = smul.addr %s373, 10
      %s375 = smul.addr %s374, 4
      %s376 = scalar_lea.vmem %s0, %s375
      %p377 = scmp.lt.s32.totalorder %s22, 1
      %s378 = scalar_select %p377, %s22, 1
      %s379 = smul.addr %s378, 10
      %s380 = smul.addr %s379, 8
      %s381 = scalar_lea.vmem %s7, %s380
      %p382 = scmp.lt.s32.totalorder %s22, 1
      %s383 = scalar_select %p382, %s22, 1
      %s384 = smul.addr %s383, 10
      %s385 = smul.addr %s384, 8
      %s386 = scalar_lea.vmem %s8, %s385
      %p387 = scmp.lt.s32.totalorder %s22, 1
      %s388 = scalar_select %p387, %s22, 1
      %s389 = smul.addr %s388, 10
      %s390 = smul.addr %s389, 8
      %s391 = scalar_lea.vmem %s9, %s390
      %p392 = scmp.lt.s32.totalorder %s22, 1
      %s393 = scalar_select %p392, %s22, 1
      %s394 = smul.addr %s393, 10
      %s395 = smul.addr %s394, 8
      %s396 = scalar_lea.vmem %s10, %s395
      %v398 = vld [vmem:[%s376] sm:$0xf]
      %v399 = vld [vmem:[%s376 + $0x4] sm:$0xf]
      %v400 = vld [vmem:[%s376 + $0x8] sm:$0xf]
      %v401 = vld [vmem:[%s376 + $0xc] sm:$0xf]
      %v402 = vld [vmem:[%s376 + $0x10] sm:$0xf]
      %v403 = vld [vmem:[%s376 + $0x14] sm:$0xf]
      %v404 = vld [vmem:[%s376 + $0x18] sm:$0xf]
      %v405 = vld [vmem:[%s376 + $0x1c] sm:$0xf]
      %v406 = vld [vmem:[%s376 + $0x20] sm:$0xf]
      %v407 = vld [vmem:[%s376 + $0x24] sm:$0xf]
      %v408 = vld [vmem:[%s1] sm:$0xf]
      %v409 = vld [vmem:[%s1 + $0x4] sm:$0x1]
      %v420 = vunpack.c.l.b16 %v398
      %v421 = vunpack.c.l.b16 %v399
      %v422 = vunpack.c.l.b16 %v400
      %v423 = vunpack.c.l.b16 %v401
      %v424 = vunpack.c.l.b16 %v402
      %v425 = vunpack.c.l.b16 %v403
      %v426 = vunpack.c.l.b16 %v404
      %v427 = vunpack.c.l.b16 %v405
      %v428 = vunpack.c.l.b16 %v406
      %v429 = vunpack.c.l.b16 %v407
      %v430 = vpack.c.b16 %v421, %v420
      %v431 = vpack.c.b16 %v423, %v422
      %v432 = vpack.c.b16 %v425, %v424
      %v433 = vpack.c.b16 %v427, %v426
      %v434 = vpack.c.b16 %v429, %v428
      %v437 = vunpack.c.l.b16 %v408
      %v438 = vunpack.c.l.b16 %v409
      %v439 = vpack.c.b16 %v438, %v437
      %vm440 = vcmask 80896
      %v442 = vsel %vm440, %v430, 0
      %v445 = vsel %vm440, %v431, 0
      %v448 = vsel %vm440, %v432, 0
      %v451 = vsel %vm440, %v433, 0
      %v454 = vsel %vm440, %v434, 0
      %vm456 = vcmask 1044480
      %v458 = vsel %vm456, %v439, 0
      %460 = vmatpush.bf16.msra.mxu0 0
      %461 = vmatpush.bf16.msra.mxu0 0
      %462 = vmatpush.bf16.msra.mxu0 0
      %463 = vmatpush.bf16.msra.mxu0 0
      %464 = vmatpush.bf16.msra.mxu0 0
      %465 = vmatpush.bf16.msra.mxu0 0
      %466 = vmatpush.bf16.msra.mxu0 0
      %467 = vmatpush.bf16.msra.mxu0 %v458
      %468 = vmatmul.bf16.gmra.mxu0 %v442
      %v469 = vpop.f32.mrf.mxu0
      %v470 = vadd.f32 0.0, %v469
      %v471 = vpop.f32.mrf.mxu0
      %v472 = vadd.f32 0.0, %v471
      %473 = vmatmul.bf16.gmra.mxu0 %v445
      %v474 = vpop.f32.mrf.mxu0
      %v475 = vadd.f32 0.0, %v474
      %v476 = vpop.f32.mrf.mxu0
      %v477 = vadd.f32 0.0, %v476
      %478 = vmatmul.bf16.gmra.mxu0 %v448
      %v479 = vpop.f32.mrf.mxu0
      %v480 = vadd.f32 0.0, %v479
      %v481 = vpop.f32.mrf.mxu0
      %v482 = vadd.f32 0.0, %v481
      %483 = vmatmul.bf16.gmra.mxu0 %v451
      %v484 = vpop.f32.mrf.mxu0
      %v485 = vadd.f32 0.0, %v484
      %v486 = vpop.f32.mrf.mxu0
      %v487 = vadd.f32 0.0, %v486
      %488 = vmatmul.bf16.gmra.mxu0 %v454
      %v489 = vpop.f32.mrf.mxu0
      %v490 = vadd.f32 0.0, %v489
      %v491 = vpop.f32.mrf.mxu0
      %v492 = vadd.f32 0.0, %v491
      %493 = vdwg.mxu0
      %v494 = vadd.f32 %v470, %v472
      %v495 = vadd.f32 %v494, %v475
      %v496 = vadd.f32 %v495, %v477
      %v497 = vadd.f32 %v496, %v480
      %v498 = vadd.f32 %v497, %v482
      %v499 = vadd.f32 %v498, %v485
      %v500 = vadd.f32 %v499, %v487
      %v501 = vadd.f32 %v500, %v490
      %vm502 = vcmask 1046528
      %v503 = vsel %vm502, %v492, 0.0
      %v504 = vadd.f32 %v501, %v503
      %v505 = vrot.slane %v504, 4
      %v506 = vadd.f32 %v504, %v505
      %v507 = vrot.slane %v506, 2
      %v508 = vadd.f32 %v506, %v507
      %v509 = vrot.slane %v508, 1
      %v510 = vadd.f32 %v508, %v509
      %v511 = vmul.f32 %v510, 0.012658228
      %v512 = vmul.f32 %v470, %v470
      %v513 = vmul.f32 %v472, %v472
      %v514 = vmul.f32 %v475, %v475
      %v515 = vmul.f32 %v477, %v477
      %v516 = vmul.f32 %v480, %v480
      %v517 = vmul.f32 %v482, %v482
      %v518 = vmul.f32 %v485, %v485
      %v519 = vmul.f32 %v487, %v487
      %v520 = vmul.f32 %v490, %v490
      %v521 = vmul.f32 %v492, %v492
      %v522 = vadd.f32 %v512, %v513
      %v523 = vadd.f32 %v522, %v514
      %v524 = vadd.f32 %v523, %v515
      %v525 = vadd.f32 %v524, %v516
      %v526 = vadd.f32 %v525, %v517
      %v527 = vadd.f32 %v526, %v518
      %v528 = vadd.f32 %v527, %v519
      %v529 = vadd.f32 %v528, %v520
      %v530 = vsel %vm502, %v521, 0.0
      %v531 = vadd.f32 %v529, %v530
      %v532 = vrot.slane %v531, 4
      %v533 = vadd.f32 %v531, %v532
      %v534 = vrot.slane %v533, 2
      %v535 = vadd.f32 %v533, %v534
      %v536 = vrot.slane %v535, 1
      %v537 = vadd.f32 %v535, %v536
      %v538 = vmul.f32 %v537, 0.012658228
      %v539 = vmul.f32 %v511, %v511
      %v540 = vsub.f32 %v538, %v539
      %v541 = vmax.f32 %v540, 0.0
      %v542 = vsub.f32 %v470, %v511
      %v543 = vsub.f32 %v472, %v511
      %v544 = vsub.f32 %v475, %v511
      %v545 = vsub.f32 %v477, %v511
      %v546 = vsub.f32 %v480, %v511
      %v547 = vsub.f32 %v482, %v511
      %v548 = vsub.f32 %v485, %v511
      %v549 = vsub.f32 %v487, %v511
      %v550 = vsub.f32 %v490, %v511
      %v551 = vsub.f32 %v492, %v511
      %v552 = vadd.f32 %v541, 1e-05
      %v553 = vrsqrt.pop %v552
      %v554 = vmul.f32 %v553, %v552
      %v555 = vmul.f32 %v554, %v553
      %v556 = vmul.f32 0.5, %v555
      %v557 = vsub.f32 1.5, %v556
      %v558 = vmul.f32 %v553, %v557
      %vm559 = vweird.f32 %v552
      %vm560 = vweird.f32 %v553
      %vm561 = vmor %vm559, %vm560
      %v562 = vsel %vm561, %v553, %v558
      %v563 = vld [vmem:[%s2] sm:$0x1]
      %v564 = vmul.f32 %v562, %v563
      %v565 = vperm.slane %v564, 0
      %v566 = vmul.f32 %v542, %v565
      %v567 = vmul.f32 %v543, %v565
      %v568 = vmul.f32 %v544, %v565
      %v569 = vmul.f32 %v545, %v565
      %v570 = vmul.f32 %v546, %v565
      %v571 = vmul.f32 %v547, %v565
      %v572 = vmul.f32 %v548, %v565
      %v573 = vmul.f32 %v549, %v565
      %v574 = vmul.f32 %v550, %v565
      %v575 = vmul.f32 %v551, %v565
      %v576 = vld [vmem:[%s3] sm:$0x1]
      %v578 = vperm.slane %v576, 0
      %v580 = vadd.f32 %v566, %v578
      %v581 = vadd.f32 %v567, %v578
      %v582 = vadd.f32 %v568, %v578
      %v583 = vadd.f32 %v569, %v578
      %v584 = vadd.f32 %v570, %v578
      %v585 = vadd.f32 %v571, %v578
      %v586 = vadd.f32 %v572, %v578
      %v587 = vadd.f32 %v573, %v578
      %v588 = vadd.f32 %v574, %v578
      %v589 = vadd.f32 %v575, %v578
      %v590 = vmul.f32 %v580, 0.5
      %v591 = vmul.f32 %v581, 0.5
      %v592 = vmul.f32 %v582, 0.5
      %v593 = vmul.f32 %v583, 0.5
      %v594 = vmul.f32 %v584, 0.5
      %v595 = vmul.f32 %v585, 0.5
      %v596 = vmul.f32 %v586, 0.5
      %v597 = vmul.f32 %v587, 0.5
      %v598 = vmul.f32 %v588, 0.5
      %v599 = vmul.f32 %v589, 0.5
      %v600 = vmul.f32 %v580, 0.70710677
      %v601 = vmul.f32 %v581, 0.70710677
      %v602 = vmul.f32 %v582, 0.70710677
      %v603 = vmul.f32 %v583, 0.70710677
      %v604 = vmul.f32 %v584, 0.70710677
      %v605 = vmul.f32 %v585, 0.70710677
      %v606 = vmul.f32 %v586, 0.70710677
      %v607 = vmul.f32 %v587, 0.70710677
      %v608 = vmul.f32 %v588, 0.70710677
      %v609 = vmul.f32 %v589, 0.70710677
      %v610 = vmul.f32 %v600, %v600
      %v611 = vmin.f32 16.0, %v610
      %v612 = vmul.f32 %v611, 2.1237322e-06
      %v613 = vadd.f32 %v612, 0.00028619796
      %v614 = vmul.f32 %v611, %v613
      %v615 = vadd.f32 %v614, 0.0036580483
      %v616 = vmul.f32 %v611, %v615
      %v617 = vadd.f32 %v616, 0.05243302
      %v618 = vmul.f32 %v611, %v617
      %v619 = vadd.f32 %v618, 0.18741608
      %v620 = vmul.f32 %v611, %v619
      %v621 = vadd.f32 %v620, 1.1283791
      %v622 = vmul.f32 %v600, %v621
      %v623 = vmul.f32 %v611, 3.8918573e-05
      %v624 = vadd.f32 %v623, 0.001143296
      %v625 = vmul.f32 %v611, %v624
      %v626 = vadd.f32 %v625, 0.014752088
      %v627 = vmul.f32 %v611, %v626
      %v628 = vadd.f32 %v627, 0.112945676
      %v629 = vmul.f32 %v611, %v628
      %v630 = vadd.f32 %v629, 0.4994258
      %v631 = vmul.f32 %v611, %v630
      %v632 = vadd.f32 %v631, 1.0
      %v633 = vrcp.pop %v632
      %v634 = vmul.f32 %v632, %v633
      %v635 = vsub.f32 1.0, %v634
      %v636 = vmul.f32 %v633, %v635
      %v637 = vadd.f32 %v633, %v636
      %vm638 = vweird.f32 %v632
      %vm639 = vweird.f32 %v633
      %vm640 = vmor %vm638, %vm639
      %v641 = vsel %vm640, %v633, %v637
      %v642 = vand.u32 2147483647, %v632
      %vm643 = vcmp.eq.f32.partialorder %v642, 8.507059e+37
      %v644 = vand.u32 %v632, 2147483648
      %v645 = vor.u32 1.1754944e-38, %v644
      %v646 = vsel %vm643, %v645, %v641
      %v647 = vmul.f32 %v622, %v646
      %v648 = vmin.f32 %v647, 1.0
      %v649 = vmax.f32 %v648, -1.0
      %v650 = vmul.f32 %v601, %v601
      %v651 = vmin.f32 16.0, %v650
      %v652 = vmul.f32 %v651, 2.1237322e-06
      %v653 = vadd.f32 %v652, 0.00028619796
      %v654 = vmul.f32 %v651, %v653
      %v655 = vadd.f32 %v654, 0.0036580483
      %v656 = vmul.f32 %v651, %v655
      %v657 = vadd.f32 %v656, 0.05243302
      %v658 = vmul.f32 %v651, %v657
      %v659 = vadd.f32 %v658, 0.18741608
      %v660 = vmul.f32 %v651, %v659
      %v661 = vadd.f32 %v660, 1.1283791
      %v662 = vmul.f32 %v601, %v661
      %v663 = vmul.f32 %v651, 3.8918573e-05
      %v664 = vadd.f32 %v663, 0.001143296
      %v665 = vmul.f32 %v651, %v664
      %v666 = vadd.f32 %v665, 0.014752088
      %v667 = vmul.f32 %v651, %v666
      %v668 = vadd.f32 %v667, 0.112945676
      %v669 = vmul.f32 %v651, %v668
      %v670 = vadd.f32 %v669, 0.4994258
      %v671 = vmul.f32 %v651, %v670
      %v672 = vadd.f32 %v671, 1.0
      %v673 = vrcp.pop %v672
      %v674 = vmul.f32 %v672, %v673
      %v675 = vsub.f32 1.0, %v674
      %v676 = vmul.f32 %v673, %v675
      %v677 = vadd.f32 %v673, %v676
      %vm678 = vweird.f32 %v672
      %vm679 = vweird.f32 %v673
      %vm680 = vmor %vm678, %vm679
      %v681 = vsel %vm680, %v673, %v677
      %v682 = vand.u32 2147483647, %v672
      %vm683 = vcmp.eq.f32.partialorder %v682, 8.507059e+37
      %v684 = vand.u32 %v672, 2147483648
      %v685 = vor.u32 1.1754944e-38, %v684
      %v686 = vsel %vm683, %v685, %v681
      %v687 = vmul.f32 %v662, %v686
      %v688 = vmin.f32 %v687, 1.0
      %v689 = vmax.f32 %v688, -1.0
      %v690 = vmul.f32 %v602, %v602
      %v691 = vmin.f32 16.0, %v690
      %v692 = vmul.f32 %v691, 2.1237322e-06
      %v693 = vadd.f32 %v692, 0.00028619796
      %v694 = vmul.f32 %v691, %v693
      %v695 = vadd.f32 %v694, 0.0036580483
      %v696 = vmul.f32 %v691, %v695
      %v697 = vadd.f32 %v696, 0.05243302
      %v698 = vmul.f32 %v691, %v697
      %v699 = vadd.f32 %v698, 0.18741608
      %v700 = vmul.f32 %v691, %v699
      %v701 = vadd.f32 %v700, 1.1283791
      %v702 = vmul.f32 %v602, %v701
      %v703 = vmul.f32 %v691, 3.8918573e-05
      %v704 = vadd.f32 %v703, 0.001143296
      %v705 = vmul.f32 %v691, %v704
      %v706 = vadd.f32 %v705, 0.014752088
      %v707 = vmul.f32 %v691, %v706
      %v708 = vadd.f32 %v707, 0.112945676
      %v709 = vmul.f32 %v691, %v708
      %v710 = vadd.f32 %v709, 0.4994258
      %v711 = vmul.f32 %v691, %v710
      %v712 = vadd.f32 %v711, 1.0
      %v713 = vrcp.pop %v712
      %v714 = vmul.f32 %v712, %v713
      %v715 = vsub.f32 1.0, %v714
      %v716 = vmul.f32 %v713, %v715
      %v717 = vadd.f32 %v713, %v716
      %vm718 = vweird.f32 %v712
      %vm719 = vweird.f32 %v713
      %vm720 = vmor %vm718, %vm719
      %v721 = vsel %vm720, %v713, %v717
      %v722 = vand.u32 2147483647, %v712
      %vm723 = vcmp.eq.f32.partialorder %v722, 8.507059e+37
      %v724 = vand.u32 %v712, 2147483648
      %v725 = vor.u32 1.1754944e-38, %v724
      %v726 = vsel %vm723, %v725, %v721
      %v727 = vmul.f32 %v702, %v726
      %v728 = vmin.f32 %v727, 1.0
      %v729 = vmax.f32 %v728, -1.0
      %v730 = vmul.f32 %v603, %v603
      %v731 = vmin.f32 16.0, %v730
      %v732 = vmul.f32 %v731, 2.1237322e-06
      %v733 = vadd.f32 %v732, 0.00028619796
      %v734 = vmul.f32 %v731, %v733
      %v735 = vadd.f32 %v734, 0.0036580483
      %v736 = vmul.f32 %v731, %v735
      %v737 = vadd.f32 %v736, 0.05243302
      %v738 = vmul.f32 %v731, %v737
      %v739 = vadd.f32 %v738, 0.18741608
      %v740 = vmul.f32 %v731, %v739
      %v741 = vadd.f32 %v740, 1.1283791
      %v742 = vmul.f32 %v603, %v741
      %v743 = vmul.f32 %v731, 3.8918573e-05
      %v744 = vadd.f32 %v743, 0.001143296
      %v745 = vmul.f32 %v731, %v744
      %v746 = vadd.f32 %v745, 0.014752088
      %v747 = vmul.f32 %v731, %v746
      %v748 = vadd.f32 %v747, 0.112945676
      %v749 = vmul.f32 %v731, %v748
      %v750 = vadd.f32 %v749, 0.4994258
      %v751 = vmul.f32 %v731, %v750
      %v752 = vadd.f32 %v751, 1.0
      %v753 = vrcp.pop %v752
      %v754 = vmul.f32 %v752, %v753
      %v755 = vsub.f32 1.0, %v754
      %v756 = vmul.f32 %v753, %v755
      %v757 = vadd.f32 %v753, %v756
      %vm758 = vweird.f32 %v752
      %vm759 = vweird.f32 %v753
      %vm760 = vmor %vm758, %vm759
      %v761 = vsel %vm760, %v753, %v757
      %v762 = vand.u32 2147483647, %v752
      %vm763 = vcmp.eq.f32.partialorder %v762, 8.507059e+37
      %v764 = vand.u32 %v752, 2147483648
      %v765 = vor.u32 1.1754944e-38, %v764
      %v766 = vsel %vm763, %v765, %v761
      %v767 = vmul.f32 %v742, %v766
      %v768 = vmin.f32 %v767, 1.0
      %v769 = vmax.f32 %v768, -1.0
      %v770 = vmul.f32 %v604, %v604
      %v771 = vmin.f32 16.0, %v770
      %v772 = vmul.f32 %v771, 2.1237322e-06
      %v773 = vadd.f32 %v772, 0.00028619796
      %v774 = vmul.f32 %v771, %v773
      %v775 = vadd.f32 %v774, 0.0036580483
      %v776 = vmul.f32 %v771, %v775
      %v777 = vadd.f32 %v776, 0.05243302
      %v778 = vmul.f32 %v771, %v777
      %v779 = vadd.f32 %v778, 0.18741608
      %v780 = vmul.f32 %v771, %v779
      %v781 = vadd.f32 %v780, 1.1283791
      %v782 = vmul.f32 %v604, %v781
      %v783 = vmul.f32 %v771, 3.8918573e-05
      %v784 = vadd.f32 %v783, 0.001143296
      %v785 = vmul.f32 %v771, %v784
      %v786 = vadd.f32 %v785, 0.014752088
      %v787 = vmul.f32 %v771, %v786
      %v788 = vadd.f32 %v787, 0.112945676
      %v789 = vmul.f32 %v771, %v788
      %v790 = vadd.f32 %v789, 0.4994258
      %v791 = vmul.f32 %v771, %v790
      %v792 = vadd.f32 %v791, 1.0
      %v793 = vrcp.pop %v792
      %v794 = vmul.f32 %v792, %v793
      %v795 = vsub.f32 1.0, %v794
      %v796 = vmul.f32 %v793, %v795
      %v797 = vadd.f32 %v793, %v796
      %vm798 = vweird.f32 %v792
      %vm799 = vweird.f32 %v793
      %vm800 = vmor %vm798, %vm799
      %v801 = vsel %vm800, %v793, %v797
      %v802 = vand.u32 2147483647, %v792
      %vm803 = vcmp.eq.f32.partialorder %v802, 8.507059e+37
      %v804 = vand.u32 %v792, 2147483648
      %v805 = vor.u32 1.1754944e-38, %v804
      %v806 = vsel %vm803, %v805, %v801
      %v807 = vmul.f32 %v782, %v806
      %v808 = vmin.f32 %v807, 1.0
      %v809 = vmax.f32 %v808, -1.0
      %v810 = vmul.f32 %v605, %v605
      %v811 = vmin.f32 16.0, %v810
      %v812 = vmul.f32 %v811, 2.1237322e-06
      %v813 = vadd.f32 %v812, 0.00028619796
      %v814 = vmul.f32 %v811, %v813
      %v815 = vadd.f32 %v814, 0.0036580483
      %v816 = vmul.f32 %v811, %v815
      %v817 = vadd.f32 %v816, 0.05243302
      %v818 = vmul.f32 %v811, %v817
      %v819 = vadd.f32 %v818, 0.18741608
      %v820 = vmul.f32 %v811, %v819
      %v821 = vadd.f32 %v820, 1.1283791
      %v822 = vmul.f32 %v605, %v821
      %v823 = vmul.f32 %v811, 3.8918573e-05
      %v824 = vadd.f32 %v823, 0.001143296
      %v825 = vmul.f32 %v811, %v824
      %v826 = vadd.f32 %v825, 0.014752088
      %v827 = vmul.f32 %v811, %v826
      %v828 = vadd.f32 %v827, 0.112945676
      %v829 = vmul.f32 %v811, %v828
      %v830 = vadd.f32 %v829, 0.4994258
      %v831 = vmul.f32 %v811, %v830
      %v832 = vadd.f32 %v831, 1.0
      %v833 = vrcp.pop %v832
      %v834 = vmul.f32 %v832, %v833
      %v835 = vsub.f32 1.0, %v834
      %v836 = vmul.f32 %v833, %v835
      %v837 = vadd.f32 %v833, %v836
      %vm838 = vweird.f32 %v832
      %vm839 = vweird.f32 %v833
      %vm840 = vmor %vm838, %vm839
      %v841 = vsel %vm840, %v833, %v837
      %v842 = vand.u32 2147483647, %v832
      %vm843 = vcmp.eq.f32.partialorder %v842, 8.507059e+37
      %v844 = vand.u32 %v832, 2147483648
      %v845 = vor.u32 1.1754944e-38, %v844
      %v846 = vsel %vm843, %v845, %v841
      %v847 = vmul.f32 %v822, %v846
      %v848 = vmin.f32 %v847, 1.0
      %v849 = vmax.f32 %v848, -1.0
      %v850 = vmul.f32 %v606, %v606
      %v851 = vmin.f32 16.0, %v850
      %v852 = vmul.f32 %v851, 2.1237322e-06
      %v853 = vadd.f32 %v852, 0.00028619796
      %v854 = vmul.f32 %v851, %v853
      %v855 = vadd.f32 %v854, 0.0036580483
      %v856 = vmul.f32 %v851, %v855
      %v857 = vadd.f32 %v856, 0.05243302
      %v858 = vmul.f32 %v851, %v857
      %v859 = vadd.f32 %v858, 0.18741608
      %v860 = vmul.f32 %v851, %v859
      %v861 = vadd.f32 %v860, 1.1283791
      %v862 = vmul.f32 %v606, %v861
      %v863 = vmul.f32 %v851, 3.8918573e-05
      %v864 = vadd.f32 %v863, 0.001143296
      %v865 = vmul.f32 %v851, %v864
      %v866 = vadd.f32 %v865, 0.014752088
      %v867 = vmul.f32 %v851, %v866
      %v868 = vadd.f32 %v867, 0.112945676
      %v869 = vmul.f32 %v851, %v868
      %v870 = vadd.f32 %v869, 0.4994258
      %v871 = vmul.f32 %v851, %v870
      %v872 = vadd.f32 %v871, 1.0
      %v873 = vrcp.pop %v872
      %v874 = vmul.f32 %v872, %v873
      %v875 = vsub.f32 1.0, %v874
      %v876 = vmul.f32 %v873, %v875
      %v877 = vadd.f32 %v873, %v876
      %vm878 = vweird.f32 %v872
      %vm879 = vweird.f32 %v873
      %vm880 = vmor %vm878, %vm879
      %v881 = vsel %vm880, %v873, %v877
      %v882 = vand.u32 2147483647, %v872
      %vm883 = vcmp.eq.f32.partialorder %v882, 8.507059e+37
      %v884 = vand.u32 %v872, 2147483648
      %v885 = vor.u32 1.1754944e-38, %v884
      %v886 = vsel %vm883, %v885, %v881
      %v887 = vmul.f32 %v862, %v886
      %v888 = vmin.f32 %v887, 1.0
      %v889 = vmax.f32 %v888, -1.0
      %v890 = vmul.f32 %v607, %v607
      %v891 = vmin.f32 16.0, %v890
      %v892 = vmul.f32 %v891, 2.1237322e-06
      %v893 = vadd.f32 %v892, 0.00028619796
      %v894 = vmul.f32 %v891, %v893
      %v895 = vadd.f32 %v894, 0.0036580483
      %v896 = vmul.f32 %v891, %v895
      %v897 = vadd.f32 %v896, 0.05243302
      %v898 = vmul.f32 %v891, %v897
      %v899 = vadd.f32 %v898, 0.18741608
      %v900 = vmul.f32 %v891, %v899
      %v901 = vadd.f32 %v900, 1.1283791
      %v902 = vmul.f32 %v607, %v901
      %v903 = vmul.f32 %v891, 3.8918573e-05
      %v904 = vadd.f32 %v903, 0.001143296
      %v905 = vmul.f32 %v891, %v904
      %v906 = vadd.f32 %v905, 0.014752088
      %v907 = vmul.f32 %v891, %v906
      %v908 = vadd.f32 %v907, 0.112945676
      %v909 = vmul.f32 %v891, %v908
      %v910 = vadd.f32 %v909, 0.4994258
      %v911 = vmul.f32 %v891, %v910
      %v912 = vadd.f32 %v911, 1.0
      %v913 = vrcp.pop %v912
      %v914 = vmul.f32 %v912, %v913
      %v915 = vsub.f32 1.0, %v914
      %v916 = vmul.f32 %v913, %v915
      %v917 = vadd.f32 %v913, %v916
      %vm918 = vweird.f32 %v912
      %vm919 = vweird.f32 %v913
      %vm920 = vmor %vm918, %vm919
      %v921 = vsel %vm920, %v913, %v917
      %v922 = vand.u32 2147483647, %v912
      %vm923 = vcmp.eq.f32.partialorder %v922, 8.507059e+37
      %v924 = vand.u32 %v912, 2147483648
      %v925 = vor.u32 1.1754944e-38, %v924
      %v926 = vsel %vm923, %v925, %v921
      %v927 = vmul.f32 %v902, %v926
      %v928 = vmin.f32 %v927, 1.0
      %v929 = vmax.f32 %v928, -1.0
      %v930 = vmul.f32 %v608, %v608
      %v931 = vmin.f32 16.0, %v930
      %v932 = vmul.f32 %v931, 2.1237322e-06
      %v933 = vadd.f32 %v932, 0.00028619796
      %v934 = vmul.f32 %v931, %v933
      %v935 = vadd.f32 %v934, 0.0036580483
      %v936 = vmul.f32 %v931, %v935
      %v937 = vadd.f32 %v936, 0.05243302
      %v938 = vmul.f32 %v931, %v937
      %v939 = vadd.f32 %v938, 0.18741608
      %v940 = vmul.f32 %v931, %v939
      %v941 = vadd.f32 %v940, 1.1283791
      %v942 = vmul.f32 %v608, %v941
      %v943 = vmul.f32 %v931, 3.8918573e-05
      %v944 = vadd.f32 %v943, 0.001143296
      %v945 = vmul.f32 %v931, %v944
      %v946 = vadd.f32 %v945, 0.014752088
      %v947 = vmul.f32 %v931, %v946
      %v948 = vadd.f32 %v947, 0.112945676
      %v949 = vmul.f32 %v931, %v948
      %v950 = vadd.f32 %v949, 0.4994258
      %v951 = vmul.f32 %v931, %v950
      %v952 = vadd.f32 %v951, 1.0
      %v953 = vrcp.pop %v952
      %v954 = vmul.f32 %v952, %v953
      %v955 = vsub.f32 1.0, %v954
      %v956 = vmul.f32 %v953, %v955
      %v957 = vadd.f32 %v953, %v956
      %vm958 = vweird.f32 %v952
      %vm959 = vweird.f32 %v953
      %vm960 = vmor %vm958, %vm959
      %v961 = vsel %vm960, %v953, %v957
      %v962 = vand.u32 2147483647, %v952
      %vm963 = vcmp.eq.f32.partialorder %v962, 8.507059e+37
      %v964 = vand.u32 %v952, 2147483648
      %v965 = vor.u32 1.1754944e-38, %v964
      %v966 = vsel %vm963, %v965, %v961
      %v967 = vmul.f32 %v942, %v966
      %v968 = vmin.f32 %v967, 1.0
      %v969 = vmax.f32 %v968, -1.0
      %v970 = vmul.f32 %v609, %v609
      %v971 = vmin.f32 16.0, %v970
      %v972 = vmul.f32 %v971, 2.1237322e-06
      %v973 = vadd.f32 %v972, 0.00028619796
      %v974 = vmul.f32 %v971, %v973
      %v975 = vadd.f32 %v974, 0.0036580483
      %v976 = vmul.f32 %v971, %v975
      %v977 = vadd.f32 %v976, 0.05243302
      %v978 = vmul.f32 %v971, %v977
      %v979 = vadd.f32 %v978, 0.18741608
      %v980 = vmul.f32 %v971, %v979
      %v981 = vadd.f32 %v980, 1.1283791
      %v982 = vmul.f32 %v609, %v981
      %v983 = vmul.f32 %v971, 3.8918573e-05
      %v984 = vadd.f32 %v983, 0.001143296
      %v985 = vmul.f32 %v971, %v984
      %v986 = vadd.f32 %v985, 0.014752088
      %v987 = vmul.f32 %v971, %v986
      %v988 = vadd.f32 %v987, 0.112945676
      %v989 = vmul.f32 %v971, %v988
      %v990 = vadd.f32 %v989, 0.4994258
      %v991 = vmul.f32 %v971, %v990
      %v992 = vadd.f32 %v991, 1.0
      %v993 = vrcp.pop %v992
      %v994 = vmul.f32 %v992, %v993
      %v995 = vsub.f32 1.0, %v994
      %v996 = vmul.f32 %v993, %v995
      %v997 = vadd.f32 %v993, %v996
      %vm998 = vweird.f32 %v992
      %vm999 = vweird.f32 %v993
      %vm1000 = vmor %vm998, %vm999
      %v1001 = vsel %vm1000, %v993, %v997
      %v1002 = vand.u32 2147483647, %v992
      %vm1003 = vcmp.eq.f32.partialorder %v1002, 8.507059e+37
      %v1004 = vand.u32 %v992, 2147483648
      %v1005 = vor.u32 1.1754944e-38, %v1004
      %v1006 = vsel %vm1003, %v1005, %v1001
      %v1007 = vmul.f32 %v982, %v1006
      %v1008 = vmin.f32 %v1007, 1.0
      %v1009 = vmax.f32 %v1008, -1.0
      %v1010 = vadd.f32 %v649, 1.0
      %v1011 = vadd.f32 %v689, 1.0
      %v1012 = vadd.f32 %v729, 1.0
      %v1013 = vadd.f32 %v769, 1.0
      %v1014 = vadd.f32 %v809, 1.0
      %v1015 = vadd.f32 %v849, 1.0
      %v1016 = vadd.f32 %v889, 1.0
      %v1017 = vadd.f32 %v929, 1.0
      %v1018 = vadd.f32 %v969, 1.0
      %v1019 = vadd.f32 %v1009, 1.0
      %v1020 = vmul.f32 %v590, %v1010
      %v1021 = vmul.f32 %v591, %v1011
      %v1022 = vmul.f32 %v592, %v1012
      %v1023 = vmul.f32 %v593, %v1013
      %v1024 = vmul.f32 %v594, %v1014
      %v1025 = vmul.f32 %v595, %v1015
      %v1026 = vmul.f32 %v596, %v1016
      %v1027 = vmul.f32 %v597, %v1017
      %v1028 = vmul.f32 %v598, %v1018
      %v1029 = vmul.f32 %v599, %v1019
      %1030 = vst [vmem:[%s381] sm:$0xff] %v1020
      %1031 = vst [vmem:[%s381 + $0x8] sm:$0xff] %v1021
      %1032 = vst [vmem:[%s381 + $0x10] sm:$0xff] %v1022
      %1033 = vst [vmem:[%s381 + $0x18] sm:$0xff] %v1023
      %1034 = vst [vmem:[%s381 + $0x20] sm:$0xff] %v1024
      %1035 = vst [vmem:[%s381 + $0x28] sm:$0xff] %v1025
      %1036 = vst [vmem:[%s381 + $0x30] sm:$0xff] %v1026
      %1037 = vst [vmem:[%s381 + $0x38] sm:$0xff] %v1027
      %1038 = vst [vmem:[%s381 + $0x40] sm:$0xff] %v1028
      %1039 = vst [vmem:[%s381 + $0x48] sm:$0x7f] %v1029
      %v1040 = vld [vmem:[%s381] ss:$2 sm:$0xff]
      %s1041 = scalar_lea.vmem %s381, 16
      %v1042 = vld [vmem:[%s1041] ss:$2 sm:$0xff]
      %s1043 = scalar_lea.vmem %s381, 32
      %v1044 = vld [vmem:[%s1043] ss:$2 sm:$0xff]
      %s1045 = scalar_lea.vmem %s381, 48
      %v1046 = vld [vmem:[%s1045] ss:$2 sm:$0xff]
      %s1047 = scalar_lea.vmem %s381, 64
      %v1048 = vld [vmem:[%s1047] ss:$2 sm:$0x7f]
      %v1049 = vpack.c.bf16 %v1042, %v1040
      %v1050 = vpack.c.bf16 %v1046, %v1044
      %v1051 = vpack.c.bf16 %v1048, %v1048
      %v1052 = vld [vmem:[%s4] sm:$0xf]
      %v1053 = vld [vmem:[%s4 + $0x4] sm:$0xf]
      %v1054 = vld [vmem:[%s4 + $0x8] sm:$0xf]
      %v1055 = vld [vmem:[%s4 + $0xc] sm:$0xf]
      %v1056 = vld [vmem:[%s4 + $0x10] sm:$0xf]
      %v1057 = vld [vmem:[%s4 + $0x14] sm:$0xf]
      %v1058 = vld [vmem:[%s4 + $0x18] sm:$0xf]
      %v1059 = vld [vmem:[%s4 + $0x1c] sm:$0xf]
      %v1060 = vld [vmem:[%s4 + $0x20] sm:$0xf]
      %v1061 = vld [vmem:[%s4 + $0x24] sm:$0xf]
      %v1062 = vld [vmem:[%s4 + $0x28] sm:$0xf]
      %v1063 = vld [vmem:[%s4 + $0x2c] sm:$0xf]
      %v1064 = vld [vmem:[%s4 + $0x30] sm:$0xf]
      %v1065 = vld [vmem:[%s4 + $0x34] sm:$0xf]
      %v1066 = vld [vmem:[%s4 + $0x38] sm:$0xf]
      %v1067 = vld [vmem:[%s4 + $0x3c] sm:$0xf]
      %s1068 = scalar_lea.vmem %s381, 1
      %v1069 = vld [vmem:[%s1068] ss:$2 sm:$0xff]
      %s1070 = scalar_lea.vmem %s381, 17
      %v1071 = vld [vmem:[%s1070] ss:$2 sm:$0xff]
      %s1072 = scalar_lea.vmem %s381, 33
      %v1073 = vld [vmem:[%s1072] ss:$2 sm:$0xff]
      %s1074 = scalar_lea.vmem %s381, 49
      %v1075 = vld [vmem:[%s1074] ss:$2 sm:$0xff]
      %s1076 = scalar_lea.vmem %s381, 65
      %v1077 = vld [vmem:[%s1076] ss:$2 sm:$0x7f]
      %v1078 = vpack.c.bf16 %v1071, %v1069
      %v1079 = vpack.c.bf16 %v1075, %v1073
      %v1080 = vpack.c.bf16 %v1077, %v1077
      %s1081 = scalar_lea.vmem %s4, 64
      %v1082 = vld [vmem:[%s1081] sm:$0xf]
      %v1083 = vld [vmem:[%s1081 + $0x4] sm:$0xf]
      %v1084 = vld [vmem:[%s1081 + $0x8] sm:$0xf]
      %v1085 = vld [vmem:[%s1081 + $0xc] sm:$0xf]
      %v1086 = vld [vmem:[%s1081 + $0x10] sm:$0xf]
      %v1087 = vld [vmem:[%s1081 + $0x14] sm:$0xf]
      %v1088 = vld [vmem:[%s1081 + $0x18] sm:$0xf]
      %v1089 = vld [vmem:[%s1081 + $0x1c] sm:$0xf]
      %v1090 = vld [vmem:[%s1081 + $0x20] sm:$0xf]
      %v1091 = vld [vmem:[%s1081 + $0x24] sm:$0xf]
      %v1092 = vld [vmem:[%s1081 + $0x28] sm:$0xf]
      %v1093 = vld [vmem:[%s1081 + $0x2c] sm:$0xf]
      %v1094 = vld [vmem:[%s1081 + $0x30] sm:$0xf]
      %v1095 = vld [vmem:[%s1081 + $0x34] sm:$0xf]
      %v1096 = vld [vmem:[%s1081 + $0x38] sm:$0xf]
      %v1097 = vld [vmem:[%s1081 + $0x3c] sm:$0xf]
      %v1114 = vunpack.c.l.b16 %v1082
      %v1115 = vunpack.c.l.b16 %v1083
      %v1116 = vunpack.c.l.b16 %v1084
      %v1117 = vunpack.c.l.b16 %v1085
      %v1118 = vunpack.c.l.b16 %v1086
      %v1119 = vunpack.c.l.b16 %v1087
      %v1120 = vunpack.c.l.b16 %v1088
      %v1121 = vunpack.c.l.b16 %v1089
      %v1122 = vunpack.c.l.b16 %v1090
      %v1123 = vunpack.c.l.b16 %v1091
      %v1124 = vunpack.c.l.b16 %v1092
      %v1125 = vunpack.c.l.b16 %v1093
      %v1126 = vunpack.c.l.b16 %v1094
      %v1127 = vunpack.c.l.b16 %v1095
      %v1128 = vunpack.c.l.b16 %v1096
      %v1129 = vunpack.c.l.b16 %v1097
      %v1130 = vpack.c.b16 %v1115, %v1114
      %v1131 = vpack.c.b16 %v1117, %v1116
      %v1132 = vpack.c.b16 %v1119, %v1118
      %v1133 = vpack.c.b16 %v1121, %v1120
      %v1134 = vpack.c.b16 %v1123, %v1122
      %v1135 = vpack.c.b16 %v1125, %v1124
      %v1136 = vpack.c.b16 %v1127, %v1126
      %v1137 = vpack.c.b16 %v1129, %v1128
      %1146 = vmatpush.bf16.msra.mxu0 %v1137
      %1147 = vmatpush.bf16.msra.mxu0 %v1136
      %1148 = vmatpush.bf16.msra.mxu0 %v1135
      %1149 = vmatpush.bf16.msra.mxu0 %v1134
      %1150 = vmatpush.bf16.msra.mxu0 %v1133
      %1151 = vmatpush.bf16.msra.mxu0 %v1132
      %1152 = vmatpush.bf16.msra.mxu0 %v1131
      %1153 = vmatpush.bf16.msra.mxu0 %v1130
      %1154 = vmatmul.bf16.gmra.mxu0 %v1078
      %v1155 = vpop.f32.mrf.mxu0
      %v1156 = vadd.f32 0.0, %v1155
      %v1157 = vpop.f32.mrf.mxu0
      %v1158 = vadd.f32 0.0, %v1157
      %1159 = vmatmul.bf16.gmra.mxu0 %v1079
      %v1160 = vpop.f32.mrf.mxu0
      %v1161 = vadd.f32 0.0, %v1160
      %v1162 = vpop.f32.mrf.mxu0
      %v1163 = vadd.f32 0.0, %v1162
      %1164 = vmatmul.bf16.gmra.mxu0 %v1080
      %v1165 = vpop.f32.mrf.mxu0
      %v1166 = vadd.f32 0.0, %v1165
      %v1167 = vpop.f32.mrf.mxu0
      %1168 = vdwg.mxu0
      %v1185 = vunpack.c.l.b16 %v1052
      %v1186 = vunpack.c.l.b16 %v1053
      %v1187 = vunpack.c.l.b16 %v1054
      %v1188 = vunpack.c.l.b16 %v1055
      %v1189 = vunpack.c.l.b16 %v1056
      %v1190 = vunpack.c.l.b16 %v1057
      %v1191 = vunpack.c.l.b16 %v1058
      %v1192 = vunpack.c.l.b16 %v1059
      %v1193 = vunpack.c.l.b16 %v1060
      %v1194 = vunpack.c.l.b16 %v1061
      %v1195 = vunpack.c.l.b16 %v1062
      %v1196 = vunpack.c.l.b16 %v1063
      %v1197 = vunpack.c.l.b16 %v1064
      %v1198 = vunpack.c.l.b16 %v1065
      %v1199 = vunpack.c.l.b16 %v1066
      %v1200 = vunpack.c.l.b16 %v1067
      %v1201 = vpack.c.b16 %v1186, %v1185
      %v1202 = vpack.c.b16 %v1188, %v1187
      %v1203 = vpack.c.b16 %v1190, %v1189
      %v1204 = vpack.c.b16 %v1192, %v1191
      %v1205 = vpack.c.b16 %v1194, %v1193
      %v1206 = vpack.c.b16 %v1196, %v1195
      %v1207 = vpack.c.b16 %v1198, %v1197
      %v1208 = vpack.c.b16 %v1200, %v1199
      %1217 = vmatpush.bf16.msra.mxu0 %v1208
      %1218 = vmatpush.bf16.msra.mxu0 %v1207
      %1219 = vmatpush.bf16.msra.mxu0 %v1206
      %1220 = vmatpush.bf16.msra.mxu0 %v1205
      %1221 = vmatpush.bf16.msra.mxu0 %v1204
      %1222 = vmatpush.bf16.msra.mxu0 %v1203
      %1223 = vmatpush.bf16.msra.mxu0 %v1202
      %1224 = vmatpush.bf16.msra.mxu0 %v1201
      %1225 = vmatmul.bf16.gmra.mxu0 %v1049
      %v1226 = vpop.f32.mrf.mxu0
      %v1227 = vadd.f32 %v1156, %v1226
      %v1228 = vpop.f32.mrf.mxu0
      %v1229 = vadd.f32 %v1158, %v1228
      %1230 = vmatmul.bf16.gmra.mxu0 %v1050
      %v1231 = vpop.f32.mrf.mxu0
      %v1232 = vadd.f32 %v1161, %v1231
      %v1233 = vpop.f32.mrf.mxu0
      %v1234 = vadd.f32 %v1163, %v1233
      %1235 = vmatmul.bf16.gmra.mxu0 %v1051
      %v1236 = vpop.f32.mrf.mxu0
      %v1237 = vadd.f32 %v1166, %v1236
      %v1238 = vpop.f32.mrf.mxu0
      %1239 = vdwg.mxu0
      %s1240 = scalar_lea.vmem %s381, 2
      %v1241 = vld [vmem:[%s1240] ss:$2 sm:$0xff]
      %s1242 = scalar_lea.vmem %s381, 18
      %v1243 = vld [vmem:[%s1242] ss:$2 sm:$0xff]
      %s1244 = scalar_lea.vmem %s381, 34
      %v1245 = vld [vmem:[%s1244] ss:$2 sm:$0xff]
      %s1246 = scalar_lea.vmem %s381, 50
      %v1247 = vld [vmem:[%s1246] ss:$2 sm:$0xff]
      %s1248 = scalar_lea.vmem %s381, 66
      %v1249 = vld [vmem:[%s1248] ss:$2 sm:$0x7f]
      %v1250 = vpack.c.bf16 %v1243, %v1241
      %v1251 = vpack.c.bf16 %v1247, %v1245
      %v1252 = vpack.c.bf16 %v1249, %v1249
      %s1253 = scalar_lea.vmem %s4, 128
      %v1254 = vld [vmem:[%s1253] sm:$0xf]
      %v1255 = vld [vmem:[%s1253 + $0x4] sm:$0xf]
      %v1256 = vld [vmem:[%s1253 + $0x8] sm:$0xf]
      %v1257 = vld [vmem:[%s1253 + $0xc] sm:$0xf]
      %v1258 = vld [vmem:[%s1253 + $0x10] sm:$0xf]
      %v1259 = vld [vmem:[%s1253 + $0x14] sm:$0xf]
      %v1260 = vld [vmem:[%s1253 + $0x18] sm:$0xf]
      %v1261 = vld [vmem:[%s1253 + $0x1c] sm:$0xf]
      %v1262 = vld [vmem:[%s1253 + $0x20] sm:$0xf]
      %v1263 = vld [vmem:[%s1253 + $0x24] sm:$0xf]
      %v1264 = vld [vmem:[%s1253 + $0x28] sm:$0xf]
      %v1265 = vld [vmem:[%s1253 + $0x2c] sm:$0xf]
      %v1266 = vld [vmem:[%s1253 + $0x30] sm:$0xf]
      %v1267 = vld [vmem:[%s1253 + $0x34] sm:$0xf]
      %v1268 = vld [vmem:[%s1253 + $0x38] sm:$0xf]
      %v1269 = vld [vmem:[%s1253 + $0x3c] sm:$0xf]
      %v1286 = vunpack.c.l.b16 %v1254
      %v1287 = vunpack.c.l.b16 %v1255
      %v1288 = vunpack.c.l.b16 %v1256
      %v1289 = vunpack.c.l.b16 %v1257
      %v1290 = vunpack.c.l.b16 %v1258
      %v1291 = vunpack.c.l.b16 %v1259
      %v1292 = vunpack.c.l.b16 %v1260
      %v1293 = vunpack.c.l.b16 %v1261
      %v1294 = vunpack.c.l.b16 %v1262
      %v1295 = vunpack.c.l.b16 %v1263
      %v1296 = vunpack.c.l.b16 %v1264
      %v1297 = vunpack.c.l.b16 %v1265
      %v1298 = vunpack.c.l.b16 %v1266
      %v1299 = vunpack.c.l.b16 %v1267
      %v1300 = vunpack.c.l.b16 %v1268
      %v1301 = vunpack.c.l.b16 %v1269
      %v1302 = vpack.c.b16 %v1287, %v1286
      %v1303 = vpack.c.b16 %v1289, %v1288
      %v1304 = vpack.c.b16 %v1291, %v1290
      %v1305 = vpack.c.b16 %v1293, %v1292
      %v1306 = vpack.c.b16 %v1295, %v1294
      %v1307 = vpack.c.b16 %v1297, %v1296
      %v1308 = vpack.c.b16 %v1299, %v1298
      %v1309 = vpack.c.b16 %v1301, %v1300
      %1318 = vmatpush.bf16.msra.mxu0 %v1309
      %1319 = vmatpush.bf16.msra.mxu0 %v1308
      %1320 = vmatpush.bf16.msra.mxu0 %v1307
      %1321 = vmatpush.bf16.msra.mxu0 %v1306
      %1322 = vmatpush.bf16.msra.mxu0 %v1305
      %1323 = vmatpush.bf16.msra.mxu0 %v1304
      %1324 = vmatpush.bf16.msra.mxu0 %v1303
      %1325 = vmatpush.bf16.msra.mxu0 %v1302
      %1326 = vmatmul.bf16.gmra.mxu0 %v1250
      %v1327 = vpop.f32.mrf.mxu0
      %v1328 = vadd.f32 0.0, %v1327
      %v1329 = vpop.f32.mrf.mxu0
      %v1330 = vadd.f32 0.0, %v1329
      %1331 = vmatmul.bf16.gmra.mxu0 %v1251
      %v1332 = vpop.f32.mrf.mxu0
      %v1333 = vadd.f32 0.0, %v1332
      %v1334 = vpop.f32.mrf.mxu0
      %v1335 = vadd.f32 0.0, %v1334
      %1336 = vmatmul.bf16.gmra.mxu0 %v1252
      %v1337 = vpop.f32.mrf.mxu0
      %v1338 = vadd.f32 0.0, %v1337
      %v1339 = vpop.f32.mrf.mxu0
      %1340 = vdwg.mxu0
      %v1341 = vadd.f32 %v1227, %v1328
      %v1342 = vadd.f32 %v1229, %v1330
      %v1343 = vadd.f32 %v1232, %v1333
      %v1344 = vadd.f32 %v1234, %v1335
      %v1345 = vadd.f32 %v1237, %v1338
      %v1346 = vmul.f32 %v1341, 0.5
      %v1347 = vmul.f32 %v1342, 0.5
      %v1348 = vmul.f32 %v1343, 0.5
      %v1349 = vmul.f32 %v1344, 0.5
      %v1350 = vmul.f32 %v1345, 0.5
      %v1351 = vmul.f32 %v1341, 0.70710677
      %v1352 = vmul.f32 %v1342, 0.70710677
      %v1353 = vmul.f32 %v1343, 0.70710677
      %v1354 = vmul.f32 %v1344, 0.70710677
      %v1355 = vmul.f32 %v1345, 0.70710677
      %v1356 = vmul.f32 %v1351, %v1351
      %v1357 = vmin.f32 16.0, %v1356
      %v1358 = vmul.f32 %v1357, 2.1237322e-06
      %v1359 = vadd.f32 %v1358, 0.00028619796
      %v1360 = vmul.f32 %v1357, %v1359
      %v1361 = vadd.f32 %v1360, 0.0036580483
      %v1362 = vmul.f32 %v1357, %v1361
      %v1363 = vadd.f32 %v1362, 0.05243302
      %v1364 = vmul.f32 %v1357, %v1363
      %v1365 = vadd.f32 %v1364, 0.18741608
      %v1366 = vmul.f32 %v1357, %v1365
      %v1367 = vadd.f32 %v1366, 1.1283791
      %v1368 = vmul.f32 %v1351, %v1367
      %v1369 = vmul.f32 %v1357, 3.8918573e-05
      %v1370 = vadd.f32 %v1369, 0.001143296
      %v1371 = vmul.f32 %v1357, %v1370
      %v1372 = vadd.f32 %v1371, 0.014752088
      %v1373 = vmul.f32 %v1357, %v1372
      %v1374 = vadd.f32 %v1373, 0.112945676
      %v1375 = vmul.f32 %v1357, %v1374
      %v1376 = vadd.f32 %v1375, 0.4994258
      %v1377 = vmul.f32 %v1357, %v1376
      %v1378 = vadd.f32 %v1377, 1.0
      %v1379 = vrcp.pop %v1378
      %v1380 = vmul.f32 %v1378, %v1379
      %v1381 = vsub.f32 1.0, %v1380
      %v1382 = vmul.f32 %v1379, %v1381
      %v1383 = vadd.f32 %v1379, %v1382
      %vm1384 = vweird.f32 %v1378
      %vm1385 = vweird.f32 %v1379
      %vm1386 = vmor %vm1384, %vm1385
      %v1387 = vsel %vm1386, %v1379, %v1383
      %v1388 = vand.u32 2147483647, %v1378
      %vm1389 = vcmp.eq.f32.partialorder %v1388, 8.507059e+37
      %v1390 = vand.u32 %v1378, 2147483648
      %v1391 = vor.u32 1.1754944e-38, %v1390
      %v1392 = vsel %vm1389, %v1391, %v1387
      %v1393 = vmul.f32 %v1368, %v1392
      %v1394 = vmin.f32 %v1393, 1.0
      %v1395 = vmax.f32 %v1394, -1.0
      %v1396 = vmul.f32 %v1352, %v1352
      %v1397 = vmin.f32 16.0, %v1396
      %v1398 = vmul.f32 %v1397, 2.1237322e-06
      %v1399 = vadd.f32 %v1398, 0.00028619796
      %v1400 = vmul.f32 %v1397, %v1399
      %v1401 = vadd.f32 %v1400, 0.0036580483
      %v1402 = vmul.f32 %v1397, %v1401
      %v1403 = vadd.f32 %v1402, 0.05243302
      %v1404 = vmul.f32 %v1397, %v1403
      %v1405 = vadd.f32 %v1404, 0.18741608
      %v1406 = vmul.f32 %v1397, %v1405
      %v1407 = vadd.f32 %v1406, 1.1283791
      %v1408 = vmul.f32 %v1352, %v1407
      %v1409 = vmul.f32 %v1397, 3.8918573e-05
      %v1410 = vadd.f32 %v1409, 0.001143296
      %v1411 = vmul.f32 %v1397, %v1410
      %v1412 = vadd.f32 %v1411, 0.014752088
      %v1413 = vmul.f32 %v1397, %v1412
      %v1414 = vadd.f32 %v1413, 0.112945676
      %v1415 = vmul.f32 %v1397, %v1414
      %v1416 = vadd.f32 %v1415, 0.4994258
      %v1417 = vmul.f32 %v1397, %v1416
      %v1418 = vadd.f32 %v1417, 1.0
      %v1419 = vrcp.pop %v1418
      %v1420 = vmul.f32 %v1418, %v1419
      %v1421 = vsub.f32 1.0, %v1420
      %v1422 = vmul.f32 %v1419, %v1421
      %v1423 = vadd.f32 %v1419, %v1422
      %vm1424 = vweird.f32 %v1418
      %vm1425 = vweird.f32 %v1419
      %vm1426 = vmor %vm1424, %vm1425
      %v1427 = vsel %vm1426, %v1419, %v1423
      %v1428 = vand.u32 2147483647, %v1418
      %vm1429 = vcmp.eq.f32.partialorder %v1428, 8.507059e+37
      %v1430 = vand.u32 %v1418, 2147483648
      %v1431 = vor.u32 1.1754944e-38, %v1430
      %v1432 = vsel %vm1429, %v1431, %v1427
      %v1433 = vmul.f32 %v1408, %v1432
      %v1434 = vmin.f32 %v1433, 1.0
      %v1435 = vmax.f32 %v1434, -1.0
      %v1436 = vmul.f32 %v1353, %v1353
      %v1437 = vmin.f32 16.0, %v1436
      %v1438 = vmul.f32 %v1437, 2.1237322e-06
      %v1439 = vadd.f32 %v1438, 0.00028619796
      %v1440 = vmul.f32 %v1437, %v1439
      %v1441 = vadd.f32 %v1440, 0.0036580483
      %v1442 = vmul.f32 %v1437, %v1441
      %v1443 = vadd.f32 %v1442, 0.05243302
      %v1444 = vmul.f32 %v1437, %v1443
      %v1445 = vadd.f32 %v1444, 0.18741608
      %v1446 = vmul.f32 %v1437, %v1445
      %v1447 = vadd.f32 %v1446, 1.1283791
      %v1448 = vmul.f32 %v1353, %v1447
      %v1449 = vmul.f32 %v1437, 3.8918573e-05
      %v1450 = vadd.f32 %v1449, 0.001143296
      %v1451 = vmul.f32 %v1437, %v1450
      %v1452 = vadd.f32 %v1451, 0.014752088
      %v1453 = vmul.f32 %v1437, %v1452
      %v1454 = vadd.f32 %v1453, 0.112945676
      %v1455 = vmul.f32 %v1437, %v1454
      %v1456 = vadd.f32 %v1455, 0.4994258
      %v1457 = vmul.f32 %v1437, %v1456
      %v1458 = vadd.f32 %v1457, 1.0
      %v1459 = vrcp.pop %v1458
      %v1460 = vmul.f32 %v1458, %v1459
      %v1461 = vsub.f32 1.0, %v1460
      %v1462 = vmul.f32 %v1459, %v1461
      %v1463 = vadd.f32 %v1459, %v1462
      %vm1464 = vweird.f32 %v1458
      %vm1465 = vweird.f32 %v1459
      %vm1466 = vmor %vm1464, %vm1465
      %v1467 = vsel %vm1466, %v1459, %v1463
      %v1468 = vand.u32 2147483647, %v1458
      %vm1469 = vcmp.eq.f32.partialorder %v1468, 8.507059e+37
      %v1470 = vand.u32 %v1458, 2147483648
      %v1471 = vor.u32 1.1754944e-38, %v1470
      %v1472 = vsel %vm1469, %v1471, %v1467
      %v1473 = vmul.f32 %v1448, %v1472
      %v1474 = vmin.f32 %v1473, 1.0
      %v1475 = vmax.f32 %v1474, -1.0
      %v1476 = vmul.f32 %v1354, %v1354
      %v1477 = vmin.f32 16.0, %v1476
      %v1478 = vmul.f32 %v1477, 2.1237322e-06
      %v1479 = vadd.f32 %v1478, 0.00028619796
      %v1480 = vmul.f32 %v1477, %v1479
      %v1481 = vadd.f32 %v1480, 0.0036580483
      %v1482 = vmul.f32 %v1477, %v1481
      %v1483 = vadd.f32 %v1482, 0.05243302
      %v1484 = vmul.f32 %v1477, %v1483
      %v1485 = vadd.f32 %v1484, 0.18741608
      %v1486 = vmul.f32 %v1477, %v1485
      %v1487 = vadd.f32 %v1486, 1.1283791
      %v1488 = vmul.f32 %v1354, %v1487
      %v1489 = vmul.f32 %v1477, 3.8918573e-05
      %v1490 = vadd.f32 %v1489, 0.001143296
      %v1491 = vmul.f32 %v1477, %v1490
      %v1492 = vadd.f32 %v1491, 0.014752088
      %v1493 = vmul.f32 %v1477, %v1492
      %v1494 = vadd.f32 %v1493, 0.112945676
      %v1495 = vmul.f32 %v1477, %v1494
      %v1496 = vadd.f32 %v1495, 0.4994258
      %v1497 = vmul.f32 %v1477, %v1496
      %v1498 = vadd.f32 %v1497, 1.0
      %v1499 = vrcp.pop %v1498
      %v1500 = vmul.f32 %v1498, %v1499
      %v1501 = vsub.f32 1.0, %v1500
      %v1502 = vmul.f32 %v1499, %v1501
      %v1503 = vadd.f32 %v1499, %v1502
      %vm1504 = vweird.f32 %v1498
      %vm1505 = vweird.f32 %v1499
      %vm1506 = vmor %vm1504, %vm1505
      %v1507 = vsel %vm1506, %v1499, %v1503
      %v1508 = vand.u32 2147483647, %v1498
      %vm1509 = vcmp.eq.f32.partialorder %v1508, 8.507059e+37
      %v1510 = vand.u32 %v1498, 2147483648
      %v1511 = vor.u32 1.1754944e-38, %v1510
      %v1512 = vsel %vm1509, %v1511, %v1507
      %v1513 = vmul.f32 %v1488, %v1512
      %v1514 = vmin.f32 %v1513, 1.0
      %v1515 = vmax.f32 %v1514, -1.0
      %v1516 = vmul.f32 %v1355, %v1355
      %v1517 = vmin.f32 16.0, %v1516
      %v1518 = vmul.f32 %v1517, 2.1237322e-06
      %v1519 = vadd.f32 %v1518, 0.00028619796
      %v1520 = vmul.f32 %v1517, %v1519
      %v1521 = vadd.f32 %v1520, 0.0036580483
      %v1522 = vmul.f32 %v1517, %v1521
      %v1523 = vadd.f32 %v1522, 0.05243302
      %v1524 = vmul.f32 %v1517, %v1523
      %v1525 = vadd.f32 %v1524, 0.18741608
      %v1526 = vmul.f32 %v1517, %v1525
      %v1527 = vadd.f32 %v1526, 1.1283791
      %v1528 = vmul.f32 %v1355, %v1527
      %v1529 = vmul.f32 %v1517, 3.8918573e-05
      %v1530 = vadd.f32 %v1529, 0.001143296
      %v1531 = vmul.f32 %v1517, %v1530
      %v1532 = vadd.f32 %v1531, 0.014752088
      %v1533 = vmul.f32 %v1517, %v1532
      %v1534 = vadd.f32 %v1533, 0.112945676
      %v1535 = vmul.f32 %v1517, %v1534
      %v1536 = vadd.f32 %v1535, 0.4994258
      %v1537 = vmul.f32 %v1517, %v1536
      %v1538 = vadd.f32 %v1537, 1.0
      %v1539 = vrcp.pop %v1538
      %v1540 = vmul.f32 %v1538, %v1539
      %v1541 = vsub.f32 1.0, %v1540
      %v1542 = vmul.f32 %v1539, %v1541
      %v1543 = vadd.f32 %v1539, %v1542
      %vm1544 = vweird.f32 %v1538
      %vm1545 = vweird.f32 %v1539
      %vm1546 = vmor %vm1544, %vm1545
      %v1547 = vsel %vm1546, %v1539, %v1543
      %v1548 = vand.u32 2147483647, %v1538
      %vm1549 = vcmp.eq.f32.partialorder %v1548, 8.507059e+37
      %v1550 = vand.u32 %v1538, 2147483648
      %v1551 = vor.u32 1.1754944e-38, %v1550
      %v1552 = vsel %vm1549, %v1551, %v1547
      %v1553 = vmul.f32 %v1528, %v1552
      %v1554 = vmin.f32 %v1553, 1.0
      %v1555 = vmax.f32 %v1554, -1.0
      %v1556 = vadd.f32 %v1395, 1.0
      %v1557 = vadd.f32 %v1435, 1.0
      %v1558 = vadd.f32 %v1475, 1.0
      %v1559 = vadd.f32 %v1515, 1.0
      %v1560 = vadd.f32 %v1555, 1.0
      %v1561 = vmul.f32 %v1346, %v1556
      %v1562 = vmul.f32 %v1347, %v1557
      %v1563 = vmul.f32 %v1348, %v1558
      %v1564 = vmul.f32 %v1349, %v1559
      %v1565 = vmul.f32 %v1350, %v1560
      %1566 = vst [vmem:[%s386] sm:$0xff] %v1561
      %1567 = vst [vmem:[%s386 + $0x8] sm:$0xff] %v1562
      %1568 = vst [vmem:[%s386 + $0x10] sm:$0xff] %v1563
      %1569 = vst [vmem:[%s386 + $0x18] sm:$0xff] %v1564
      %1570 = vst [vmem:[%s386 + $0x20] sm:$0x7f] %v1565
      %1571 = vst [vmem:[%s386 + $0x27] sm:$0xff] 0.0
      %1572 = vst [vmem:[%s386 + $0x2f] sm:$0xff] 0.0
      %1573 = vst [vmem:[%s386 + $0x37] sm:$0xff] 0.0
      %1574 = vst [vmem:[%s386 + $0x3f] sm:$0xff] 0.0
      %1575 = vst [vmem:[%s386 + $0x47] sm:$0xff] 0.0
      %v1576 = vld [vmem:[%s386] ss:$2 sm:$0xff]
      %s1577 = scalar_lea.vmem %s386, 16
      %v1578 = vld [vmem:[%s1577] ss:$2 sm:$0xff]
      %s1579 = scalar_lea.vmem %s386, 32
      %v1580 = vld [vmem:[%s1579] ss:$2 sm:$0x7]
      %v1581 = vpack.c.bf16 %v1578, %v1576
      %v1582 = vpack.c.bf16 %v1580, %v1580
      %v1583 = vld [vmem:[%s5] sm:$0xf]
      %v1584 = vld [vmem:[%s5 + $0x4] sm:$0xf]
      %v1585 = vld [vmem:[%s5 + $0x8] sm:$0xf]
      %v1586 = vld [vmem:[%s5 + $0xc] sm:$0xf]
      %v1587 = vld [vmem:[%s5 + $0x10] sm:$0xf]
      %v1588 = vld [vmem:[%s5 + $0x14] sm:$0xf]
      %v1589 = vld [vmem:[%s5 + $0x18] sm:$0xf]
      %v1590 = vld [vmem:[%s5 + $0x1c] sm:$0xf]
      %v1591 = vld [vmem:[%s5 + $0x20] sm:$0xf]
      %v1592 = vld [vmem:[%s5 + $0x24] sm:$0xf]
      %v1593 = vld [vmem:[%s5 + $0x28] sm:$0xf]
      %v1594 = vld [vmem:[%s5 + $0x2c] sm:$0xf]
      %v1595 = vld [vmem:[%s5 + $0x30] sm:$0xf]
      %v1596 = vld [vmem:[%s5 + $0x34] sm:$0xf]
      %v1597 = vld [vmem:[%s5 + $0x38] sm:$0xf]
      %v1598 = vld [vmem:[%s5 + $0x3c] sm:$0xf]
      %s1599 = scalar_lea.vmem %s386, 1
      %v1600 = vld [vmem:[%s1599] ss:$2 sm:$0xff]
      %s1601 = scalar_lea.vmem %s386, 17
      %v1602 = vld [vmem:[%s1601] ss:$2 sm:$0xff]
      %s1603 = scalar_lea.vmem %s386, 33
      %v1604 = vld [vmem:[%s1603] ss:$2 sm:$0x7]
      %v1605 = vpack.c.bf16 %v1602, %v1600
      %v1606 = vpack.c.bf16 %v1604, %v1604
      %s1607 = scalar_lea.vmem %s5, 64
      %v1608 = vld [vmem:[%s1607] sm:$0xf]
      %v1609 = vld [vmem:[%s1607 + $0x4] sm:$0xf]
      %v1610 = vld [vmem:[%s1607 + $0x8] sm:$0xf]
      %v1611 = vld [vmem:[%s1607 + $0xc] sm:$0xf]
      %v1612 = vld [vmem:[%s1607 + $0x10] sm:$0xf]
      %v1613 = vld [vmem:[%s1607 + $0x14] sm:$0xf]
      %v1614 = vld [vmem:[%s1607 + $0x18] sm:$0xf]
      %v1615 = vld [vmem:[%s1607 + $0x1c] sm:$0xf]
      %v1616 = vld [vmem:[%s1607 + $0x20] sm:$0xf]
      %v1617 = vld [vmem:[%s1607 + $0x24] sm:$0xf]
      %v1618 = vld [vmem:[%s1607 + $0x28] sm:$0xf]
      %v1619 = vld [vmem:[%s1607 + $0x2c] sm:$0xf]
      %v1620 = vld [vmem:[%s1607 + $0x30] sm:$0xf]
      %v1621 = vld [vmem:[%s1607 + $0x34] sm:$0xf]
      %v1622 = vld [vmem:[%s1607 + $0x38] sm:$0xf]
      %v1623 = vld [vmem:[%s1607 + $0x3c] sm:$0xf]
      %v1640 = vunpack.c.l.b16 %v1608
      %v1641 = vunpack.c.l.b16 %v1609
      %v1642 = vunpack.c.l.b16 %v1610
      %v1643 = vunpack.c.l.b16 %v1611
      %v1644 = vunpack.c.l.b16 %v1612
      %v1645 = vunpack.c.l.b16 %v1613
      %v1646 = vunpack.c.l.b16 %v1614
      %v1647 = vunpack.c.l.b16 %v1615
      %v1648 = vunpack.c.l.b16 %v1616
      %v1649 = vunpack.c.l.b16 %v1617
      %v1650 = vunpack.c.l.b16 %v1618
      %v1651 = vunpack.c.l.b16 %v1619
      %v1652 = vunpack.c.l.b16 %v1620
      %v1653 = vunpack.c.l.b16 %v1621
      %v1654 = vunpack.c.l.b16 %v1622
      %v1655 = vunpack.c.l.b16 %v1623
      %v1656 = vpack.c.b16 %v1641, %v1640
      %v1657 = vpack.c.b16 %v1643, %v1642
      %v1658 = vpack.c.b16 %v1645, %v1644
      %v1659 = vpack.c.b16 %v1647, %v1646
      %v1660 = vpack.c.b16 %v1649, %v1648
      %v1661 = vpack.c.b16 %v1651, %v1650
      %v1662 = vpack.c.b16 %v1653, %v1652
      %v1663 = vpack.c.b16 %v1655, %v1654
      %1672 = vmatpush.bf16.msra.mxu0 %v1663
      %1673 = vmatpush.bf16.msra.mxu0 %v1662
      %1674 = vmatpush.bf16.msra.mxu0 %v1661
      %1675 = vmatpush.bf16.msra.mxu0 %v1660
      %1676 = vmatpush.bf16.msra.mxu0 %v1659
      %1677 = vmatpush.bf16.msra.mxu0 %v1658
      %1678 = vmatpush.bf16.msra.mxu0 %v1657
      %1679 = vmatpush.bf16.msra.mxu0 %v1656
      %1680 = vmatmul.bf16.gmra.mxu0 %v1605
      %v1681 = vpop.f32.mrf.mxu0
      %v1682 = vadd.f32 0.0, %v1681
      %v1683 = vpop.f32.mrf.mxu0
      %v1684 = vadd.f32 0.0, %v1683
      %1685 = vmatmul.bf16.gmra.mxu0 %v1606
      %v1686 = vpop.f32.mrf.mxu0
      %v1687 = vadd.f32 0.0, %v1686
      %v1688 = vpop.f32.mrf.mxu0
      %1689 = vdwg.mxu0
      %v1706 = vunpack.c.l.b16 %v1583
      %v1707 = vunpack.c.l.b16 %v1584
      %v1708 = vunpack.c.l.b16 %v1585
      %v1709 = vunpack.c.l.b16 %v1586
      %v1710 = vunpack.c.l.b16 %v1587
      %v1711 = vunpack.c.l.b16 %v1588
      %v1712 = vunpack.c.l.b16 %v1589
      %v1713 = vunpack.c.l.b16 %v1590
      %v1714 = vunpack.c.l.b16 %v1591
      %v1715 = vunpack.c.l.b16 %v1592
      %v1716 = vunpack.c.l.b16 %v1593
      %v1717 = vunpack.c.l.b16 %v1594
      %v1718 = vunpack.c.l.b16 %v1595
      %v1719 = vunpack.c.l.b16 %v1596
      %v1720 = vunpack.c.l.b16 %v1597
      %v1721 = vunpack.c.l.b16 %v1598
      %v1722 = vpack.c.b16 %v1707, %v1706
      %v1723 = vpack.c.b16 %v1709, %v1708
      %v1724 = vpack.c.b16 %v1711, %v1710
      %v1725 = vpack.c.b16 %v1713, %v1712
      %v1726 = vpack.c.b16 %v1715, %v1714
      %v1727 = vpack.c.b16 %v1717, %v1716
      %v1728 = vpack.c.b16 %v1719, %v1718
      %v1729 = vpack.c.b16 %v1721, %v1720
      %1738 = vmatpush.bf16.msra.mxu0 %v1729
      %1739 = vmatpush.bf16.msra.mxu0 %v1728
      %1740 = vmatpush.bf16.msra.mxu0 %v1727
      %1741 = vmatpush.bf16.msra.mxu0 %v1726
      %1742 = vmatpush.bf16.msra.mxu0 %v1725
      %1743 = vmatpush.bf16.msra.mxu0 %v1724
      %1744 = vmatpush.bf16.msra.mxu0 %v1723
      %1745 = vmatpush.bf16.msra.mxu0 %v1722
      %1746 = vmatmul.bf16.gmra.mxu0 %v1581
      %v1747 = vpop.f32.mrf.mxu0
      %v1748 = vadd.f32 %v1682, %v1747
      %v1749 = vpop.f32.mrf.mxu0
      %v1750 = vadd.f32 %v1684, %v1749
      %1751 = vmatmul.bf16.gmra.mxu0 %v1582
      %v1752 = vpop.f32.mrf.mxu0
      %v1753 = vadd.f32 %v1687, %v1752
      %v1754 = vpop.f32.mrf.mxu0
      %1755 = vdwg.mxu0
      %s1756 = scalar_lea.vmem %s386, 2
      %v1757 = vld [vmem:[%s1756] ss:$2 sm:$0xff]
      %s1758 = scalar_lea.vmem %s386, 18
      %v1759 = vld [vmem:[%s1758] ss:$2 sm:$0xff]
      %s1760 = scalar_lea.vmem %s386, 34
      %v1761 = vld [vmem:[%s1760] ss:$2 sm:$0x7]
      %v1762 = vpack.c.bf16 %v1759, %v1757
      %v1763 = vpack.c.bf16 %v1761, %v1761
      %s1764 = scalar_lea.vmem %s5, 128
      %v1765 = vld [vmem:[%s1764] sm:$0xf]
      %v1766 = vld [vmem:[%s1764 + $0x4] sm:$0xf]
      %v1767 = vld [vmem:[%s1764 + $0x8] sm:$0xf]
      %v1768 = vld [vmem:[%s1764 + $0xc] sm:$0xf]
      %v1769 = vld [vmem:[%s1764 + $0x10] sm:$0xf]
      %v1770 = vld [vmem:[%s1764 + $0x14] sm:$0xf]
      %v1771 = vld [vmem:[%s1764 + $0x18] sm:$0xf]
      %v1772 = vld [vmem:[%s1764 + $0x1c] sm:$0xf]
      %v1773 = vld [vmem:[%s1764 + $0x20] sm:$0xf]
      %v1774 = vld [vmem:[%s1764 + $0x24] sm:$0xf]
      %v1775 = vld [vmem:[%s1764 + $0x28] sm:$0xf]
      %v1776 = vld [vmem:[%s1764 + $0x2c] sm:$0xf]
      %v1777 = vld [vmem:[%s1764 + $0x30] sm:$0xf]
      %v1778 = vld [vmem:[%s1764 + $0x34] sm:$0xf]
      %v1779 = vld [vmem:[%s1764 + $0x38] sm:$0xf]
      %v1780 = vld [vmem:[%s1764 + $0x3c] sm:$0xf]
      %v1797 = vunpack.c.l.b16 %v1765
      %v1798 = vunpack.c.l.b16 %v1766
      %v1799 = vunpack.c.l.b16 %v1767
      %v1800 = vunpack.c.l.b16 %v1768
      %v1801 = vunpack.c.l.b16 %v1769
      %v1802 = vunpack.c.l.b16 %v1770
      %v1803 = vunpack.c.l.b16 %v1771
      %v1804 = vunpack.c.l.b16 %v1772
      %v1805 = vunpack.c.l.b16 %v1773
      %v1806 = vunpack.c.l.b16 %v1774
      %v1807 = vunpack.c.l.b16 %v1775
      %v1808 = vunpack.c.l.b16 %v1776
      %v1809 = vunpack.c.l.b16 %v1777
      %v1810 = vunpack.c.l.b16 %v1778
      %v1811 = vunpack.c.l.b16 %v1779
      %v1812 = vunpack.c.l.b16 %v1780
      %v1813 = vpack.c.b16 %v1798, %v1797
      %v1814 = vpack.c.b16 %v1800, %v1799
      %v1815 = vpack.c.b16 %v1802, %v1801
      %v1816 = vpack.c.b16 %v1804, %v1803
      %v1817 = vpack.c.b16 %v1806, %v1805
      %v1818 = vpack.c.b16 %v1808, %v1807
      %v1819 = vpack.c.b16 %v1810, %v1809
      %v1820 = vpack.c.b16 %v1812, %v1811
      %1829 = vmatpush.bf16.msra.mxu0 %v1820
      %1830 = vmatpush.bf16.msra.mxu0 %v1819
      %1831 = vmatpush.bf16.msra.mxu0 %v1818
      %1832 = vmatpush.bf16.msra.mxu0 %v1817
      %1833 = vmatpush.bf16.msra.mxu0 %v1816
      %1834 = vmatpush.bf16.msra.mxu0 %v1815
      %1835 = vmatpush.bf16.msra.mxu0 %v1814
      %1836 = vmatpush.bf16.msra.mxu0 %v1813
      %1837 = vmatmul.bf16.gmra.mxu0 %v1762
      %v1838 = vpop.f32.mrf.mxu0
      %v1839 = vadd.f32 0.0, %v1838
      %v1840 = vpop.f32.mrf.mxu0
      %v1841 = vadd.f32 0.0, %v1840
      %1842 = vmatmul.bf16.gmra.mxu0 %v1763
      %v1843 = vpop.f32.mrf.mxu0
      %v1844 = vadd.f32 0.0, %v1843
      %v1845 = vpop.f32.mrf.mxu0
      %1846 = vdwg.mxu0
      %v1847 = vadd.f32 %v1748, %v1839
      %v1848 = vadd.f32 %v1750, %v1841
      %v1849 = vadd.f32 %v1753, %v1844
      %v1850 = vmul.f32 %v1847, 0.5
      %v1851 = vmul.f32 %v1848, 0.5
      %v1852 = vmul.f32 %v1849, 0.5
      %v1853 = vmul.f32 %v1847, 0.70710677
      %v1854 = vmul.f32 %v1848, 0.70710677
      %v1855 = vmul.f32 %v1849, 0.70710677
      %v1856 = vmul.f32 %v1853, %v1853
      %v1857 = vmin.f32 16.0, %v1856
      %v1858 = vmul.f32 %v1857, 2.1237322e-06
      %v1859 = vadd.f32 %v1858, 0.00028619796
      %v1860 = vmul.f32 %v1857, %v1859
      %v1861 = vadd.f32 %v1860, 0.0036580483
      %v1862 = vmul.f32 %v1857, %v1861
      %v1863 = vadd.f32 %v1862, 0.05243302
      %v1864 = vmul.f32 %v1857, %v1863
      %v1865 = vadd.f32 %v1864, 0.18741608
      %v1866 = vmul.f32 %v1857, %v1865
      %v1867 = vadd.f32 %v1866, 1.1283791
      %v1868 = vmul.f32 %v1853, %v1867
      %v1869 = vmul.f32 %v1857, 3.8918573e-05
      %v1870 = vadd.f32 %v1869, 0.001143296
      %v1871 = vmul.f32 %v1857, %v1870
      %v1872 = vadd.f32 %v1871, 0.014752088
      %v1873 = vmul.f32 %v1857, %v1872
      %v1874 = vadd.f32 %v1873, 0.112945676
      %v1875 = vmul.f32 %v1857, %v1874
      %v1876 = vadd.f32 %v1875, 0.4994258
      %v1877 = vmul.f32 %v1857, %v1876
      %v1878 = vadd.f32 %v1877, 1.0
      %v1879 = vrcp.pop %v1878
      %v1880 = vmul.f32 %v1878, %v1879
      %v1881 = vsub.f32 1.0, %v1880
      %v1882 = vmul.f32 %v1879, %v1881
      %v1883 = vadd.f32 %v1879, %v1882
      %vm1884 = vweird.f32 %v1878
      %vm1885 = vweird.f32 %v1879
      %vm1886 = vmor %vm1884, %vm1885
      %v1887 = vsel %vm1886, %v1879, %v1883
      %v1888 = vand.u32 2147483647, %v1878
      %vm1889 = vcmp.eq.f32.partialorder %v1888, 8.507059e+37
      %v1890 = vand.u32 %v1878, 2147483648
      %v1891 = vor.u32 1.1754944e-38, %v1890
      %v1892 = vsel %vm1889, %v1891, %v1887
      %v1893 = vmul.f32 %v1868, %v1892
      %v1894 = vmin.f32 %v1893, 1.0
      %v1895 = vmax.f32 %v1894, -1.0
      %v1896 = vmul.f32 %v1854, %v1854
      %v1897 = vmin.f32 16.0, %v1896
      %v1898 = vmul.f32 %v1897, 2.1237322e-06
      %v1899 = vadd.f32 %v1898, 0.00028619796
      %v1900 = vmul.f32 %v1897, %v1899
      %v1901 = vadd.f32 %v1900, 0.0036580483
      %v1902 = vmul.f32 %v1897, %v1901
      %v1903 = vadd.f32 %v1902, 0.05243302
      %v1904 = vmul.f32 %v1897, %v1903
      %v1905 = vadd.f32 %v1904, 0.18741608
      %v1906 = vmul.f32 %v1897, %v1905
      %v1907 = vadd.f32 %v1906, 1.1283791
      %v1908 = vmul.f32 %v1854, %v1907
      %v1909 = vmul.f32 %v1897, 3.8918573e-05
      %v1910 = vadd.f32 %v1909, 0.001143296
      %v1911 = vmul.f32 %v1897, %v1910
      %v1912 = vadd.f32 %v1911, 0.014752088
      %v1913 = vmul.f32 %v1897, %v1912
      %v1914 = vadd.f32 %v1913, 0.112945676
      %v1915 = vmul.f32 %v1897, %v1914
      %v1916 = vadd.f32 %v1915, 0.4994258
      %v1917 = vmul.f32 %v1897, %v1916
      %v1918 = vadd.f32 %v1917, 1.0
      %v1919 = vrcp.pop %v1918
      %v1920 = vmul.f32 %v1918, %v1919
      %v1921 = vsub.f32 1.0, %v1920
      %v1922 = vmul.f32 %v1919, %v1921
      %v1923 = vadd.f32 %v1919, %v1922
      %vm1924 = vweird.f32 %v1918
      %vm1925 = vweird.f32 %v1919
      %vm1926 = vmor %vm1924, %vm1925
      %v1927 = vsel %vm1926, %v1919, %v1923
      %v1928 = vand.u32 2147483647, %v1918
      %vm1929 = vcmp.eq.f32.partialorder %v1928, 8.507059e+37
      %v1930 = vand.u32 %v1918, 2147483648
      %v1931 = vor.u32 1.1754944e-38, %v1930
      %v1932 = vsel %vm1929, %v1931, %v1927
      %v1933 = vmul.f32 %v1908, %v1932
      %v1934 = vmin.f32 %v1933, 1.0
      %v1935 = vmax.f32 %v1934, -1.0
      %v1936 = vmul.f32 %v1855, %v1855
      %v1937 = vmin.f32 16.0, %v1936
      %v1938 = vmul.f32 %v1937, 2.1237322e-06
      %v1939 = vadd.f32 %v1938, 0.00028619796
      %v1940 = vmul.f32 %v1937, %v1939
      %v1941 = vadd.f32 %v1940, 0.0036580483
      %v1942 = vmul.f32 %v1937, %v1941
      %v1943 = vadd.f32 %v1942, 0.05243302
      %v1944 = vmul.f32 %v1937, %v1943
      %v1945 = vadd.f32 %v1944, 0.18741608
      %v1946 = vmul.f32 %v1937, %v1945
      %v1947 = vadd.f32 %v1946, 1.1283791
      %v1948 = vmul.f32 %v1855, %v1947
      %v1949 = vmul.f32 %v1937, 3.8918573e-05
      %v1950 = vadd.f32 %v1949, 0.001143296
      %v1951 = vmul.f32 %v1937, %v1950
      %v1952 = vadd.f32 %v1951, 0.014752088
      %v1953 = vmul.f32 %v1937, %v1952
      %v1954 = vadd.f32 %v1953, 0.112945676
      %v1955 = vmul.f32 %v1937, %v1954
      %v1956 = vadd.f32 %v1955, 0.4994258
      %v1957 = vmul.f32 %v1937, %v1956
      %v1958 = vadd.f32 %v1957, 1.0
      %v1959 = vrcp.pop %v1958
      %v1960 = vmul.f32 %v1958, %v1959
      %v1961 = vsub.f32 1.0, %v1960
      %v1962 = vmul.f32 %v1959, %v1961
      %v1963 = vadd.f32 %v1959, %v1962
      %vm1964 = vweird.f32 %v1958
      %vm1965 = vweird.f32 %v1959
      %vm1966 = vmor %vm1964, %vm1965
      %v1967 = vsel %vm1966, %v1959, %v1963
      %v1968 = vand.u32 2147483647, %v1958
      %vm1969 = vcmp.eq.f32.partialorder %v1968, 8.507059e+37
      %v1970 = vand.u32 %v1958, 2147483648
      %v1971 = vor.u32 1.1754944e-38, %v1970
      %v1972 = vsel %vm1969, %v1971, %v1967
      %v1973 = vmul.f32 %v1948, %v1972
      %v1974 = vmin.f32 %v1973, 1.0
      %v1975 = vmax.f32 %v1974, -1.0
      %v1976 = vadd.f32 %v1895, 1.0
      %v1977 = vadd.f32 %v1935, 1.0
      %v1978 = vadd.f32 %v1975, 1.0
      %v1979 = vmul.f32 %v1850, %v1976
      %v1980 = vmul.f32 %v1851, %v1977
      %v1981 = vmul.f32 %v1852, %v1978
      %1982 = vst [vmem:[%s391] sm:$0xff] %v1979
      %1983 = vst [vmem:[%s391 + $0x8] sm:$0xff] %v1980
      %1984 = vst [vmem:[%s391 + $0x10] sm:$0x7] %v1981
      %1985 = vst [vmem:[%s391 + $0x13] sm:$0xff] 0.0
      %1986 = vst [vmem:[%s391 + $0x1b] sm:$0xff] 0.0
      %1987 = vst [vmem:[%s391 + $0x23] sm:$0xff] 0.0
      %1988 = vst [vmem:[%s391 + $0x2b] sm:$0xff] 0.0
      %1989 = vst [vmem:[%s391 + $0x33] sm:$0xff] 0.0
      %1990 = vst [vmem:[%s391 + $0x3b] sm:$0xff] 0.0
      %1991 = vst [vmem:[%s391 + $0x43] sm:$0xff] 0.0
      %1992 = vst [vmem:[%s391 + $0x4b] sm:$0xf] 0.0
      %v1993 = vld [vmem:[%s391] ss:$2 sm:$0xff]
      %s1994 = scalar_lea.vmem %s391, 16
      %v1995 = vld [vmem:[%s1994] ss:$2 sm:$0x1]
      %v1996 = vpack.c.bf16 %v1995, %v1993
      %v1997 = vld [vmem:[%s6] sm:$0xf]
      %v1998 = vld [vmem:[%s6 + $0x4] sm:$0xf]
      %v1999 = vld [vmem:[%s6 + $0x8] sm:$0xf]
      %v2000 = vld [vmem:[%s6 + $0xc] sm:$0xf]
      %v2001 = vld [vmem:[%s6 + $0x10] sm:$0xf]
      %v2002 = vld [vmem:[%s6 + $0x14] sm:$0xf]
      %v2003 = vld [vmem:[%s6 + $0x18] sm:$0xf]
      %v2004 = vld [vmem:[%s6 + $0x1c] sm:$0xf]
      %v2005 = vld [vmem:[%s6 + $0x20] sm:$0xf]
      %v2006 = vld [vmem:[%s6 + $0x24] sm:$0xf]
      %v2007 = vld [vmem:[%s6 + $0x28] sm:$0xf]
      %v2008 = vld [vmem:[%s6 + $0x2c] sm:$0xf]
      %v2009 = vld [vmem:[%s6 + $0x30] sm:$0xf]
      %v2010 = vld [vmem:[%s6 + $0x34] sm:$0xf]
      %v2011 = vld [vmem:[%s6 + $0x38] sm:$0xf]
      %v2012 = vld [vmem:[%s6 + $0x3c] sm:$0xf]
      %s2013 = scalar_lea.vmem %s391, 1
      %v2014 = vld [vmem:[%s2013] ss:$2 sm:$0xff]
      %s2015 = scalar_lea.vmem %s391, 17
      %v2016 = vld [vmem:[%s2015] ss:$2 sm:$0x1]
      %v2017 = vpack.c.bf16 %v2016, %v2014
      %s2018 = scalar_lea.vmem %s6, 64
      %v2019 = vld [vmem:[%s2018] sm:$0xf]
      %v2020 = vld [vmem:[%s2018 + $0x4] sm:$0xf]
      %v2021 = vld [vmem:[%s2018 + $0x8] sm:$0xf]
      %v2022 = vld [vmem:[%s2018 + $0xc] sm:$0xf]
      %v2023 = vld [vmem:[%s2018 + $0x10] sm:$0xf]
      %v2024 = vld [vmem:[%s2018 + $0x14] sm:$0xf]
      %v2025 = vld [vmem:[%s2018 + $0x18] sm:$0xf]
      %v2026 = vld [vmem:[%s2018 + $0x1c] sm:$0xf]
      %v2027 = vld [vmem:[%s2018 + $0x20] sm:$0xf]
      %v2028 = vld [vmem:[%s2018 + $0x24] sm:$0xf]
      %v2029 = vld [vmem:[%s2018 + $0x28] sm:$0xf]
      %v2030 = vld [vmem:[%s2018 + $0x2c] sm:$0xf]
      %v2031 = vld [vmem:[%s2018 + $0x30] sm:$0xf]
      %v2032 = vld [vmem:[%s2018 + $0x34] sm:$0xf]
      %v2033 = vld [vmem:[%s2018 + $0x38] sm:$0xf]
      %v2034 = vld [vmem:[%s2018 + $0x3c] sm:$0xf]
      %v2051 = vunpack.c.l.b16 %v2019
      %v2052 = vunpack.c.l.b16 %v2020
      %v2053 = vunpack.c.l.b16 %v2021
      %v2054 = vunpack.c.l.b16 %v2022
      %v2055 = vunpack.c.l.b16 %v2023
      %v2056 = vunpack.c.l.b16 %v2024
      %v2057 = vunpack.c.l.b16 %v2025
      %v2058 = vunpack.c.l.b16 %v2026
      %v2059 = vunpack.c.l.b16 %v2027
      %v2060 = vunpack.c.l.b16 %v2028
      %v2061 = vunpack.c.l.b16 %v2029
      %v2062 = vunpack.c.l.b16 %v2030
      %v2063 = vunpack.c.l.b16 %v2031
      %v2064 = vunpack.c.l.b16 %v2032
      %v2065 = vunpack.c.l.b16 %v2033
      %v2066 = vunpack.c.l.b16 %v2034
      %v2067 = vpack.c.b16 %v2052, %v2051
      %v2068 = vpack.c.b16 %v2054, %v2053
      %v2069 = vpack.c.b16 %v2056, %v2055
      %v2070 = vpack.c.b16 %v2058, %v2057
      %v2071 = vpack.c.b16 %v2060, %v2059
      %v2072 = vpack.c.b16 %v2062, %v2061
      %v2073 = vpack.c.b16 %v2064, %v2063
      %v2074 = vpack.c.b16 %v2066, %v2065
      %2083 = vmatpush.bf16.msra.mxu0 %v2074
      %2084 = vmatpush.bf16.msra.mxu0 %v2073
      %2085 = vmatpush.bf16.msra.mxu0 %v2072
      %2086 = vmatpush.bf16.msra.mxu0 %v2071
      %2087 = vmatpush.bf16.msra.mxu0 %v2070
      %2088 = vmatpush.bf16.msra.mxu0 %v2069
      %2089 = vmatpush.bf16.msra.mxu0 %v2068
      %2090 = vmatpush.bf16.msra.mxu0 %v2067
      %2091 = vmatmul.bf16.gmra.mxu0 %v2017
      %v2092 = vpop.f32.mrf.mxu0
      %v2093 = vadd.f32 0.0, %v2092
      %v2094 = vpop.f32.mrf.mxu0
      %v2095 = vadd.f32 0.0, %v2094
      %2096 = vdwg.mxu0
      %v2113 = vunpack.c.l.b16 %v1997
      %v2114 = vunpack.c.l.b16 %v1998
      %v2115 = vunpack.c.l.b16 %v1999
      %v2116 = vunpack.c.l.b16 %v2000
      %v2117 = vunpack.c.l.b16 %v2001
      %v2118 = vunpack.c.l.b16 %v2002
      %v2119 = vunpack.c.l.b16 %v2003
      %v2120 = vunpack.c.l.b16 %v2004
      %v2121 = vunpack.c.l.b16 %v2005
      %v2122 = vunpack.c.l.b16 %v2006
      %v2123 = vunpack.c.l.b16 %v2007
      %v2124 = vunpack.c.l.b16 %v2008
      %v2125 = vunpack.c.l.b16 %v2009
      %v2126 = vunpack.c.l.b16 %v2010
      %v2127 = vunpack.c.l.b16 %v2011
      %v2128 = vunpack.c.l.b16 %v2012
      %v2129 = vpack.c.b16 %v2114, %v2113
      %v2130 = vpack.c.b16 %v2116, %v2115
      %v2131 = vpack.c.b16 %v2118, %v2117
      %v2132 = vpack.c.b16 %v2120, %v2119
      %v2133 = vpack.c.b16 %v2122, %v2121
      %v2134 = vpack.c.b16 %v2124, %v2123
      %v2135 = vpack.c.b16 %v2126, %v2125
      %v2136 = vpack.c.b16 %v2128, %v2127
      %2145 = vmatpush.bf16.msra.mxu0 %v2136
      %2146 = vmatpush.bf16.msra.mxu0 %v2135
      %2147 = vmatpush.bf16.msra.mxu0 %v2134
      %2148 = vmatpush.bf16.msra.mxu0 %v2133
      %2149 = vmatpush.bf16.msra.mxu0 %v2132
      %2150 = vmatpush.bf16.msra.mxu0 %v2131
      %2151 = vmatpush.bf16.msra.mxu0 %v2130
      %2152 = vmatpush.bf16.msra.mxu0 %v2129
      %2153 = vmatmul.bf16.gmra.mxu0 %v1996
      %v2154 = vpop.f32.mrf.mxu0
      %v2155 = vadd.f32 %v2093, %v2154
      %v2156 = vpop.f32.mrf.mxu0
      %v2157 = vadd.f32 %v2095, %v2156
      %2158 = vdwg.mxu0
      %v2159 = vmul.f32 %v2155, 0.5
      %v2160 = vmul.f32 %v2157, 0.5
      %v2161 = vmul.f32 %v2155, 0.70710677
      %v2162 = vmul.f32 %v2157, 0.70710677
      %v2163 = vmul.f32 %v2161, %v2161
      %v2164 = vmin.f32 16.0, %v2163
      %v2165 = vmul.f32 %v2164, 2.1237322e-06
      %v2166 = vadd.f32 %v2165, 0.00028619796
      %v2167 = vmul.f32 %v2164, %v2166
      %v2168 = vadd.f32 %v2167, 0.0036580483
      %v2169 = vmul.f32 %v2164, %v2168
      %v2170 = vadd.f32 %v2169, 0.05243302
      %v2171 = vmul.f32 %v2164, %v2170
      %v2172 = vadd.f32 %v2171, 0.18741608
      %v2173 = vmul.f32 %v2164, %v2172
      %v2174 = vadd.f32 %v2173, 1.1283791
      %v2175 = vmul.f32 %v2161, %v2174
      %v2176 = vmul.f32 %v2164, 3.8918573e-05
      %v2177 = vadd.f32 %v2176, 0.001143296
      %v2178 = vmul.f32 %v2164, %v2177
      %v2179 = vadd.f32 %v2178, 0.014752088
      %v2180 = vmul.f32 %v2164, %v2179
      %v2181 = vadd.f32 %v2180, 0.112945676
      %v2182 = vmul.f32 %v2164, %v2181
      %v2183 = vadd.f32 %v2182, 0.4994258
      %v2184 = vmul.f32 %v2164, %v2183
      %v2185 = vadd.f32 %v2184, 1.0
      %v2186 = vrcp.pop %v2185
      %v2187 = vmul.f32 %v2185, %v2186
      %v2188 = vsub.f32 1.0, %v2187
      %v2189 = vmul.f32 %v2186, %v2188
      %v2190 = vadd.f32 %v2186, %v2189
      %vm2191 = vweird.f32 %v2185
      %vm2192 = vweird.f32 %v2186
      %vm2193 = vmor %vm2191, %vm2192
      %v2194 = vsel %vm2193, %v2186, %v2190
      %v2195 = vand.u32 2147483647, %v2185
      %vm2196 = vcmp.eq.f32.partialorder %v2195, 8.507059e+37
      %v2197 = vand.u32 %v2185, 2147483648
      %v2198 = vor.u32 1.1754944e-38, %v2197
      %v2199 = vsel %vm2196, %v2198, %v2194
      %v2200 = vmul.f32 %v2175, %v2199
      %v2201 = vmin.f32 %v2200, 1.0
      %v2202 = vmax.f32 %v2201, -1.0
      %v2203 = vmul.f32 %v2162, %v2162
      %v2204 = vmin.f32 16.0, %v2203
      %v2205 = vmul.f32 %v2204, 2.1237322e-06
      %v2206 = vadd.f32 %v2205, 0.00028619796
      %v2207 = vmul.f32 %v2204, %v2206
      %v2208 = vadd.f32 %v2207, 0.0036580483
      %v2209 = vmul.f32 %v2204, %v2208
      %v2210 = vadd.f32 %v2209, 0.05243302
      %v2211 = vmul.f32 %v2204, %v2210
      %v2212 = vadd.f32 %v2211, 0.18741608
      %v2213 = vmul.f32 %v2204, %v2212
      %v2214 = vadd.f32 %v2213, 1.1283791
      %v2215 = vmul.f32 %v2162, %v2214
      %v2216 = vmul.f32 %v2204, 3.8918573e-05
      %v2217 = vadd.f32 %v2216, 0.001143296
      %v2218 = vmul.f32 %v2204, %v2217
      %v2219 = vadd.f32 %v2218, 0.014752088
      %v2220 = vmul.f32 %v2204, %v2219
      %v2221 = vadd.f32 %v2220, 0.112945676
      %v2222 = vmul.f32 %v2204, %v2221
      %v2223 = vadd.f32 %v2222, 0.4994258
      %v2224 = vmul.f32 %v2204, %v2223
      %v2225 = vadd.f32 %v2224, 1.0
      %v2226 = vrcp.pop %v2225
      %v2227 = vmul.f32 %v2225, %v2226
      %v2228 = vsub.f32 1.0, %v2227
      %v2229 = vmul.f32 %v2226, %v2228
      %v2230 = vadd.f32 %v2226, %v2229
      %vm2231 = vweird.f32 %v2225
      %vm2232 = vweird.f32 %v2226
      %vm2233 = vmor %vm2231, %vm2232
      %v2234 = vsel %vm2233, %v2226, %v2230
      %v2235 = vand.u32 2147483647, %v2225
      %vm2236 = vcmp.eq.f32.partialorder %v2235, 8.507059e+37
      %v2237 = vand.u32 %v2225, 2147483648
      %v2238 = vor.u32 1.1754944e-38, %v2237
      %v2239 = vsel %vm2236, %v2238, %v2234
      %v2240 = vmul.f32 %v2215, %v2239
      %v2241 = vmin.f32 %v2240, 1.0
      %v2242 = vmax.f32 %v2241, -1.0
      %v2243 = vadd.f32 %v2202, 1.0
      %v2244 = vadd.f32 %v2242, 1.0
      %v2245 = vmul.f32 %v2159, %v2243
      %v2246 = vmul.f32 %v2160, %v2244
      %2247 = vst [vmem:[%s396] sm:$0xff] %v2245
      %2248 = vst [vmem:[%s396 + $0x8] sm:$0x1] %v2246
      %2249 = vst [vmem:[%s396 + $0x9] sm:$0xff] 0.0
      %2250 = vst [vmem:[%s396 + $0x11] sm:$0xff] 0.0
      %2251 = vst [vmem:[%s396 + $0x19] sm:$0xff] 0.0
      %2252 = vst [vmem:[%s396 + $0x21] sm:$0xff] 0.0
      %2253 = vst [vmem:[%s396 + $0x29] sm:$0xff] 0.0
      %2254 = vst [vmem:[%s396 + $0x31] sm:$0xff] 0.0
      %2255 = vst [vmem:[%s396 + $0x39] sm:$0xff] 0.0
      %2256 = vst [vmem:[%s396 + $0x41] sm:$0xff] 0.0
      %2257 = vst [vmem:[%s396 + $0x49] sm:$0x3f] 0.0
      %p2258 = scmp.lt.s32.totalorder %s22, 1
      %s2259 = scalar_select %p2258, %s22, 1
      %s2260 = smul.addr %s2259, 10
      %s2261 = smul.addr %s2260, 8
      %s2262 = scalar_lea.vmem %s7, %s2261
      %p2263 = scmp.lt.s32.totalorder %s22, 1
      %s2264 = scalar_select %p2263, %s22, 1
      %s2265 = smul.addr %s2264, 10
      %s2266 = smul.addr %s2265, 8
      %s2267 = scalar_lea.vmem %s8, %s2266
      %p2268 = scmp.lt.s32.totalorder %s22, 1
      %s2269 = scalar_select %p2268, %s22, 1
      %s2270 = smul.addr %s2269, 10
      %s2271 = smul.addr %s2270, 8
      %s2272 = scalar_lea.vmem %s9, %s2271
      %p2273 = scmp.lt.s32.totalorder %s22, 1
      %s2274 = scalar_select %p2273, %s22, 1
      %s2275 = smul.addr %s2274, 10
      %s2276 = smul.addr %s2275, 8
      %s2277 = scalar_lea.vmem %s10, %s2276
      // Predicated region
      $region49: #{wavlm_feature_extractor_layers.1} parent=47 // pred_check
        %p2278 = pneg %p192
      $region50: #{wavlm_feature_extractor_layers.1} parent=47 // pred_check_branch
        %2280 = sbr.rel (%p2278) target = $region52
      $region51: #{wavlm_feature_extractor_layers.1} parent=47 // pred_region
        _
      $region52: #{wavlm_feature_extractor_layers.1} parent=47 // pred_fallthru
        _
      // Predicated region
      $region53: #{wavlm_feature_extractor_layers.1} parent=47 // pred_check
        %p2281 = pneg %p218
      $region54: #{wavlm_feature_extractor_layers.1} parent=47 // pred_check_branch
        %2283 = sbr.rel (%p2281) target = $region56
      $region55: #{wavlm_feature_extractor_layers.1} parent=47 // pred_region
        _
      $region56: #{wavlm_feature_extractor_layers.1} parent=47 // pred_fallthru
        _
      // Predicated region
      $region57: #{wavlm_feature_extractor_layers.1} parent=47 // pred_check
        %p2284 = pneg %p244
      $region58: #{wavlm_feature_extractor_layers.1} parent=47 // pred_check_branch
        %2286 = sbr.rel (%p2284) target = $region60
      $region59: #{wavlm_feature_extractor_layers.1} parent=47 // pred_region
        _
      $region60: #{wavlm_feature_extractor_layers.1} parent=47 // pred_fallthru
        _
      // Predicated region
      $region61: #{wavlm_feature_extractor_layers.1} parent=47 // pred_check
        %p2287 = pneg %p270
      $region62: #{wavlm_feature_extractor_layers.1} parent=47 // pred_check_branch
        %2289 = sbr.rel (%p2287) target = $region64
      $region63: #{wavlm_feature_extractor_layers.1} parent=47 // pred_region
        _
      $region64: #{wavlm_feature_extractor_layers.1} parent=47 // pred_fallthru
        _
    $region48: #{wavlm_feature_extractor_layers.1} parent=5 // pred_fallthru
      _
    %p2290 = scmp.le.s32.totalorder 2, %s17
    // Predicated region
    $region65: #{wavlm_feature_extractor_layers.1} parent=5 // pred_check
      %p2291 = pneg %p2290
    $region66: #{wavlm_feature_extractor_layers.1} parent=5 // pred_check_branch
      %2293 = sbr.rel (%p2291) target = $region68
    $region67: #{wavlm_feature_extractor_layers.1} parent=5 // pred_region
      %s2294 = ssub.s32 %s17, 2
      // Predicated region
      $region69: #{wavlm_feature_extractor_layers.1} parent=67 // pred_check
        %p2295 = pneg %p198
      $region70: #{wavlm_feature_extractor_layers.1} parent=67 // pred_check_branch
        %2297 = sbr.rel (%p2295) target = $region72
      $region71: #{wavlm_feature_extractor_layers.1} parent=67 // pred_region
        %p2298 = scmp.lt.s32.totalorder %s23, 1
        %s2299 = scalar_select %p2298, %s23, 1
        %s2300 = smul.addr %s2299, 10
        %s2301 = smul.addr %s2300, 8
        %s2302 = scalar_lea.vmem %s7, %s2301
      $region72: #{wavlm_feature_extractor_layers.1} parent=67 // pred_fallthru
        _
      // Predicated region
      $region73: #{wavlm_feature_extractor_layers.1} parent=67 // pred_check
        %p2303 = pneg %p224
      $region74: #{wavlm_feature_extractor_layers.1} parent=67 // pred_check_branch
        %2305 = sbr.rel (%p2303) target = $region76
      $region75: #{wavlm_feature_extractor_layers.1} parent=67 // pred_region
        %p2306 = scmp.lt.s32.totalorder %s23, 1
        %s2307 = scalar_select %p2306, %s23, 1
        %s2308 = smul.addr %s2307, 10
        %s2309 = smul.addr %s2308, 8
        %s2310 = scalar_lea.vmem %s8, %s2309
      $region76: #{wavlm_feature_extractor_layers.1} parent=67 // pred_fallthru
        _
      // Predicated region
      $region77: #{wavlm_feature_extractor_layers.1} parent=67 // pred_check
        %p2311 = pneg %p250
      $region78: #{wavlm_feature_extractor_layers.1} parent=67 // pred_check_branch
        %2313 = sbr.rel (%p2311) target = $region80
      $region79: #{wavlm_feature_extractor_layers.1} parent=67 // pred_region
        %p2314 = scmp.lt.s32.totalorder %s23, 1
        %s2315 = scalar_select %p2314, %s23, 1
        %s2316 = smul.addr %s2315, 10
        %s2317 = smul.addr %s2316, 8
        %s2318 = scalar_lea.vmem %s9, %s2317
      $region80: #{wavlm_feature_extractor_layers.1} parent=67 // pred_fallthru
        _
      // Predicated region
      $region81: #{wavlm_feature_extractor_layers.1} parent=67 // pred_check
        %p2319 = pneg %p276
      $region82: #{wavlm_feature_extractor_layers.1} parent=67 // pred_check_branch
        %2321 = sbr.rel (%p2319) target = $region84
      $region83: #{wavlm_feature_extractor_layers.1} parent=67 // pred_region
        %p2322 = scmp.lt.s32.totalorder %s23, 1
        %s2323 = scalar_select %p2322, %s23, 1
        %s2324 = smul.addr %s2323, 10
        %s2325 = smul.addr %s2324, 8
        %s2326 = scalar_lea.vmem %s10, %s2325
      $region84: #{wavlm_feature_extractor_layers.1} parent=67 // pred_fallthru
        _
    $region68: #{wavlm_feature_extractor_layers.1} parent=5 // pred_fallthru
      _
  $region6: #{wavlm_feature_extractor_layers.1} parent=0 // loop_footer
    %s21 = sadd.s32 1, %s17
  $region7: #{wavlm_feature_extractor_layers.1} parent=0 // loop_footer_branch
    %16 = sbr.rel target = $region3
  $region8: #{wavlm_feature_extractor_layers.1} parent=0 // loop_exit
    _

</llo_original>
